<compile_context>
chip_gen: v7x
topology: tpu7x:2x2x1
jax: 0.10.0
libtpu: 0.0.40
codegen_flags: <defaults>
</compile_context>

<pallas_src>
import jax
import jax.numpy as jnp
from jax import lax
from jax.experimental import pallas as pl
from jax.experimental.pallas import tpu as pltpu

KK = 768      # hidden width (kk in the PyTorch module)
D_IN = 384    # input feature width
EPS = 1e-5    # nn.BatchNorm1d default eps


# ---------------------------------------------------------------------------
# Kernel: 3 fused (BN-folded) layers on one batch tile.
# ---------------------------------------------------------------------------
def model_kernel(x_ref, w1_ref, b1_ref, w2_ref, b2_ref, w3_ref, b3_ref, out_ref):
    # x arrives as f32 (halves HBM traffic vs a wrapper-side pre-cast pass);
    # cast to bf16 on the VPU right before feeding the MXU.
    x = x_ref[...].astype(jnp.bfloat16)                          # (tile_b, 384)

    # net1: Linear(384 -> 768) + ReLU   (BN1 folded into w1/b1), f32 accumulate on MXU
    a = jnp.dot(x, w1_ref[...], preferred_element_type=jnp.float32) + b1_ref[...]
    a = jnp.maximum(a, 0.0)

    # net2: Linear(768 -> 768) + ReLU   (BN2 folded), residual add with a
    h = jnp.dot(a.astype(jnp.bfloat16), w2_ref[...],
                preferred_element_type=jnp.float32) + b2_ref[...]
    h = jnp.maximum(h, 0.0)
    b = h + a

    # net3: 1-column linear (BN3 folded) as VPU multiply + lane reduction, then sigmoid.
    # Avoids a 1-output-lane MXU matmul; the cross-lane reduce goes to the XLU slot.
    logits = jnp.sum(b * w3_ref[...], axis=-1, keepdims=True) + b3_ref[...]
    out_ref[...] = jax.nn.sigmoid(logits).astype(out_ref.dtype)


# ---------------------------------------------------------------------------
# Parameter handling: fold inference BatchNorm into the following Linear.
# ---------------------------------------------------------------------------
def _fold_bn_into_linear(gamma, beta, mean, var, w, b):
    # BN(x) = x * s + t with s = gamma*rsqrt(var+eps), t = beta - mean*s
    # BN(x) @ W + b = x @ (s[:,None]*W) + (t @ W + b)
    s = gamma * lax.rsqrt(var + EPS)                    # (1, in)
    t = beta - mean * s                                 # (1, in)
    w_f = w * jnp.reshape(s, (-1, 1))                   # (in, out)
    b_f = b + t @ w                                     # (1, out)
    return w_f, b_f


def prepare_params(params):
    """Fold all three BNs and cast the big matmul weights to bf16."""
    (g1, be1, m1, v1, w1, b1,
     g2, be2, m2, v2, w2, b2,
     g3, be3, m3, v3, w3, b3) = params

    w1f, b1f = _fold_bn_into_linear(g1, be1, m1, v1, w1, b1)
    w2f, b2f = _fold_bn_into_linear(g2, be2, m2, v2, w2, b2)
    w3f, b3f = _fold_bn_into_linear(g3, be3, m3, v3, w3, b3)

    return (w1f.astype(jnp.bfloat16), b1f,               # (384,768) bf16, (1,768) f32
            w2f.astype(jnp.bfloat16), b2f,               # (768,768) bf16, (1,768) f32
            jnp.reshape(w3f, (1, KK)),                   # (1,768) f32 row for VPU path
            b3f)                                         # (1,1)   f32


# ---------------------------------------------------------------------------
# Wrapper: tiling, padding, pallas_call.
# ---------------------------------------------------------------------------
def model_retrieval_forward(x, params, *, tile_b=512):
    """x: (N, 384) float32 -> (N, 1) float32 (sigmoid probabilities)."""
    N, d = x.shape
    assert d == D_IN

    w1, b1, w2, b2, w3row, b3 = prepare_params(params)

    # Batch tile: multiple of 16 (bf16 sublane packing); don't over-tile tiny batches.
    tile_b = max(16, (int(tile_b) // 16) * 16)
    tile_b = min(tile_b, pl.cdiv(N, 16) * 16)
    n_pad = pl.cdiv(N, tile_b) * tile_b

    xin = x
    if n_pad != N:
        # Padded rows are independent (running-stats BN), sliced off below.
        xin = jnp.pad(xin, ((0, n_pad - N), (0, 0)))

    grid = (n_pad // tile_b,)

    def const(shape):
        return pl.BlockSpec(shape, lambda i: (0, 0))     # fetched once (constant index)

    out = pl.pallas_call(
        model_kernel,
        out_shape=jax.ShapeDtypeStruct((n_pad, 1), jnp.float32),
        grid_spec=pltpu.PrefetchScalarGridSpec(
            num_scalar_prefetch=0,
            grid=grid,
            in_specs=[
                pl.BlockSpec((tile_b, D_IN), lambda i: (i, 0)),   # x batch tile (f32)
                const((D_IN, KK)), const((1, KK)),                # layer1 W/b (BN folded)
                const((KK, KK)),   const((1, KK)),                # layer2 W/b (BN folded)
                const((1, KK)),    const((1, 1)),                 # layer3 w-row / b
            ],
            out_specs=pl.BlockSpec((tile_b, 1), lambda i: (i, 0)),
        ),
        compiler_params=pltpu.CompilerParams(
            dimension_semantics=("parallel",),           # megacore-shard batch tiles
            vmem_limit_bytes=32 << 20,                   # headroom for tile_b=512 on v5e
        ),
    )(xin, w1, b1, w2, b2, w3row, b3)

    return out[:N]


# ---------------------------------------------------------------------------
# Parameter init (PyTorch-like) and JAX references.
# ---------------------------------------------------------------------------
def init_params(key):
    """Linear: U(+-1/sqrt(fan_in)).  BN: non-trivial gamma/beta/running stats so the
    BN-folding path is actually exercised (PyTorch defaults would make BN ~identity)."""
    ks = jax.random.split(key, 18)

    def linear(kw, kb, fan_in, fan_out):
        bound = 1.0 / jnp.sqrt(fan_in)
        w = jax.random.uniform(kw, (fan_in, fan_out), jnp.float32, -bound, bound)
        b = jax.random.uniform(kb, (1, fan_out), jnp.float32, -bound, bound)
        return w, b

    def bn(kg, kb, km, kv, dim):
        gamma = jax.random.uniform(kg, (1, dim), jnp.float32, 0.5, 1.5)
        beta = 0.1 * jax.random.normal(kb, (1, dim), jnp.float32)
        mean = 0.1 * jax.random.normal(km, (1, dim), jnp.float32)
        var = jax.random.uniform(kv, (1, dim), jnp.float32, 0.5, 1.5)
        return gamma, beta, mean, var

    g1, be1, m1, v1 = bn(ks[0], ks[1], ks[2], ks[3], D_IN)
    w1, b1 = linear(ks[4], ks[5], D_IN, KK)
    g2, be2, m2, v2 = bn(ks[6], ks[7], ks[8], ks[9], KK)
    w2, b2 = linear(ks[10], ks[11], KK, KK)
    g3, be3, m3, v3 = bn(ks[12], ks[13], ks[14], ks[15], KK)
    w3, b3 = linear(ks[16], ks[17], KK, 1)

    return (g1, be1, m1, v1, w1, b1,
            g2, be2, m2, v2, w2, b2,
            g3, be3, m3, v3, w3, b3)


def reference_forward_f32(x, params):
    """Full-precision reference matching the PyTorch module (inference BN)."""
    (g1, be1, m1, v1, w1, b1,
     g2, be2, m2, v2, w2, b2,
     g3, be3, m3, v3, w3, b3) = params

    def bn(x, g, be, m, v):
        return (x - m) * lax.rsqrt(v + EPS) * g + be

    a = jnp.maximum(bn(x, g1, be1, m1, v1) @ w1 + b1, 0.0)
    h = jnp.maximum(bn(a, g2, be2, m2, v2) @ w2 + b2, 0.0)
    b = h + a
    return jax.nn.sigmoid(bn(b, g3, be3, m3, v3) @ w3 + b3)


def reference_same_precision(x, params):
    """Reference using the same BN folding + bf16 MXU operands as the kernel."""
    w1, b1, w2, b2, w3row, b3 = prepare_params(params)
    xb = x.astype(jnp.bfloat16)
    a = jnp.maximum(jnp.dot(xb, w1, preferred_element_type=jnp.float32) + b1, 0.0)
    h = jnp.maximum(jnp.dot(a.astype(jnp.bfloat16), w2,
                            preferred_element_type=jnp.float32) + b2, 0.0)
    b = h + a
    logits = jnp.sum(b * w3row, axis=-1, keepdims=True) + b3
    return jax.nn.sigmoid(logits)


# ---------------------------------------------------------------------------
if __name__ == "__main__":
    key = jax.random.PRNGKey(0)
    kx, kp = jax.random.split(key)
    params = init_params(kp)

    # Small smoke test (single grid step, no padding needed).
    N1 = 16
    x1 = jax.random.normal(kx, (N1, D_IN), jnp.float32)
    out1 = jax.block_until_ready(model_retrieval_forward(x1, params))
    assert out1.shape == (N1, 1)

    # Multi-step grid + padding path (N not a multiple of the tile).
    N2 = 300
    x2 = jax.random.normal(jax.random.fold_in(kx, 1), (N2, D_IN), jnp.float32)
    out2 = jax.block_until_ready(model_retrieval_forward(x2, params, tile_b=128))
    assert out2.shape == (N2, 1)

    for x, out in ((x1, out1), (x2, out2)):
        ref_same = reference_same_precision(x, params)   # same numerics as kernel
        ref_f32 = reference_forward_f32(x, params)       # module semantics, full f32
        assert jnp.allclose(out, ref_same, atol=1e-4, rtol=1e-4), \
            "kernel mismatch vs same-precision reference"
        assert jnp.allclose(out, ref_f32, atol=1e-2, rtol=1e-2), \
            "kernel mismatch vs full-f32 module reference (beyond bf16 tolerance)"

    print("KERNEL_OK")
</pallas_src>

<mosaic_0001>
module attributes {stable_mosaic.version = 11 : i64} {
  func.func @model_kernel(%arg0: i32, %arg1: memref<16x384xf32, #tpu.memory_space<vmem>>, %arg2: memref<384x768xbf16, #tpu.memory_space<vmem>>, %arg3: memref<1x768xf32, #tpu.memory_space<vmem>>, %arg4: memref<768x768xbf16, #tpu.memory_space<vmem>>, %arg5: memref<1x768xf32, #tpu.memory_space<vmem>>, %arg6: memref<1x768xf32, #tpu.memory_space<vmem>>, %arg7: memref<1x1xf32, #tpu.memory_space<vmem>>, %arg8: memref<16x1xf32, #tpu.memory_space<vmem>>) attributes {dimension_semantics = [#tpu.dimension_semantics<parallel>], iteration_bounds = array<i64: 1>, scalar_prefetch = 0 : i64, scratch_operands = 0 : i64, tpu.core_type = #tpu.core_type<tc>, window_params = [{transform_indices = @transform_0, window_bounds = array<i64: 16, 384>}, {pipeline_mode = #tpu.pipeline_mode<synchronous>, transform_indices = @transform_1, window_bounds = array<i64: 384, 768>}, {pipeline_mode = #tpu.pipeline_mode<synchronous>, transform_indices = @transform_2, window_bounds = array<i64: 1, 768>}, {pipeline_mode = #tpu.pipeline_mode<synchronous>, transform_indices = @transform_3, window_bounds = array<i64: 768, 768>}, {pipeline_mode = #tpu.pipeline_mode<synchronous>, transform_indices = @transform_4, window_bounds = array<i64: 1, 768>}, {pipeline_mode = #tpu.pipeline_mode<synchronous>, transform_indices = @transform_5, window_bounds = array<i64: 1, 768>}, {pipeline_mode = #tpu.pipeline_mode<synchronous>, transform_indices = @transform_6, window_bounds = array<i64: 1, 1>}, {transform_indices = @transform_7, window_bounds = array<i64: 16, 1>}]} {
    %c0 = arith.constant 0 : index
    %c0_0 = arith.constant 0 : index
    %0 = vector.load %arg1[%c0, %c0_0] : memref<16x384xf32, #tpu.memory_space<vmem>>, vector<16x384xf32>
    %1 = arith.truncf %0 : vector<16x384xf32> to vector<16x384xbf16>
    %c0_1 = arith.constant 0 : index
    %c0_2 = arith.constant 0 : index
    %2 = vector.load %arg2[%c0_1, %c0_2] : memref<384x768xbf16, #tpu.memory_space<vmem>>, vector<384x768xbf16>
    %cst = arith.constant dense<0.000000e+00> : vector<16x768xf32>
    %3 = tpu.matmul %1, %2, %cst {dimension_numbers = #tpu.dot_dimension_numbers<[1], [0], [0], [1], [0, 0, 1, 1], [], []>} : vector<16x384xbf16>, vector<384x768xbf16>, vector<16x768xf32> -> vector<16x768xf32>
    %c0_3 = arith.constant 0 : index
    %c0_4 = arith.constant 0 : index
    %4 = vector.load %arg3[%c0_3, %c0_4] : memref<1x768xf32, #tpu.memory_space<vmem>>, vector<1x768xf32>
    %5 = vector.broadcast %4 : vector<1x768xf32> to vector<16x768xf32>
    %6 = arith.addf %3, %5 : vector<16x768xf32>
    %cst_5 = arith.constant 0.000000e+00 : f32
    %7 = vector.broadcast %cst_5 : f32 to vector<16x768xf32>
    %8 = arith.maximumf %6, %7 : vector<16x768xf32>
    %9 = arith.truncf %8 : vector<16x768xf32> to vector<16x768xbf16>
    %c0_6 = arith.constant 0 : index
    %c0_7 = arith.constant 0 : index
    %10 = vector.load %arg4[%c0_6, %c0_7] : memref<768x768xbf16, #tpu.memory_space<vmem>>, vector<768x768xbf16>
    %cst_8 = arith.constant dense<0.000000e+00> : vector<16x768xf32>
    %11 = tpu.matmul %9, %10, %cst_8 {dimension_numbers = #tpu.dot_dimension_numbers<[1], [0], [0], [1], [0, 0, 1, 1], [], []>} : vector<16x768xbf16>, vector<768x768xbf16>, vector<16x768xf32> -> vector<16x768xf32>
    %c0_9 = arith.constant 0 : index
    %c0_10 = arith.constant 0 : index
    %12 = vector.load %arg5[%c0_9, %c0_10] : memref<1x768xf32, #tpu.memory_space<vmem>>, vector<1x768xf32>
    %13 = vector.broadcast %12 : vector<1x768xf32> to vector<16x768xf32>
    %14 = arith.addf %11, %13 : vector<16x768xf32>
    %cst_11 = arith.constant 0.000000e+00 : f32
    %15 = vector.broadcast %cst_11 : f32 to vector<16x768xf32>
    %16 = arith.maximumf %14, %15 : vector<16x768xf32>
    %17 = arith.addf %16, %8 : vector<16x768xf32>
    %c0_12 = arith.constant 0 : index
    %c0_13 = arith.constant 0 : index
    %18 = vector.load %arg6[%c0_12, %c0_13] : memref<1x768xf32, #tpu.memory_space<vmem>>, vector<1x768xf32>
    %19 = vector.broadcast %18 : vector<1x768xf32> to vector<16x768xf32>
    %20 = arith.mulf %17, %19 : vector<16x768xf32>
    %cst_14 = arith.constant dense<0.000000e+00> : vector<16xf32>
    %21 = vector.multi_reduction <add>, %20, %cst_14 [1] : vector<16x768xf32> to vector<16xf32>
    %22 = vector.shape_cast %21 : vector<16xf32> to vector<16x1xf32>
    %c0_15 = arith.constant 0 : index
    %c0_16 = arith.constant 0 : index
    %23 = vector.load %arg7[%c0_15, %c0_16] : memref<1x1xf32, #tpu.memory_space<vmem>>, vector<1x1xf32>
    %24 = vector.broadcast %23 : vector<1x1xf32> to vector<16x1xf32>
    %25 = arith.addf %22, %24 : vector<16x1xf32>
    %26 = arith.negf %25 : vector<16x1xf32>
    %27 = math.exp %26 : vector<16x1xf32>
    %cst_17 = arith.constant 1.000000e+00 : f32
    %28 = vector.broadcast %cst_17 : f32 to vector<16x1xf32>
    %29 = arith.addf %28, %27 : vector<16x1xf32>
    %30 = arith.divf %28, %29 : vector<16x1xf32>
    %c0_18 = arith.constant 0 : index
    %c0_19 = arith.constant 0 : index
    %31 = vector.load %arg8[%c0_18, %c0_19] : memref<16x1xf32, #tpu.memory_space<vmem>>, vector<16x1xf32>
    tpu.vector_store %arg8[%c0_18, %c0_19], %30 {strides = array<i32>} : memref<16x1xf32, #tpu.memory_space<vmem>>, vector<16x1xf32>,
    return
  }
  func.func @transform_0(%arg0: i32) -> (i32, i32) {
    %c0_i32 = arith.constant 0 : i32
    %c0_i32_0 = arith.constant 0 : i32
    return %arg0, %c0_i32 : i32, i32
  }
  func.func @transform_1(%arg0: i32) -> (i32, i32) {
    %c0_i32 = arith.constant 0 : i32
    %c0_i32_0 = arith.constant 0 : i32
    %c0_i32_1 = arith.constant 0 : i32
    return %c0_i32, %c0_i32_0 : i32, i32
  }
  func.func @transform_2(%arg0: i32) -> (i32, i32) {
    %c0_i32 = arith.constant 0 : i32
    %c0_i32_0 = arith.constant 0 : i32
    %c0_i32_1 = arith.constant 0 : i32
    return %c0_i32, %c0_i32_0 : i32, i32
  }
  func.func @transform_3(%arg0: i32) -> (i32, i32) {
    %c0_i32 = arith.constant 0 : i32
    %c0_i32_0 = arith.constant 0 : i32
    %c0_i32_1 = arith.constant 0 : i32
    return %c0_i32, %c0_i32_0 : i32, i32
  }
  func.func @transform_4(%arg0: i32) -> (i32, i32) {
    %c0_i32 = arith.constant 0 : i32
    %c0_i32_0 = arith.constant 0 : i32
    %c0_i32_1 = arith.constant 0 : i32
    return %c0_i32, %c0_i32_0 : i32, i32
  }
  func.func @transform_5(%arg0: i32) -> (i32, i32) {
    %c0_i32 = arith.constant 0 : i32
    %c0_i32_0 = arith.constant 0 : i32
    %c0_i32_1 = arith.constant 0 : i32
    return %c0_i32, %c0_i32_0 : i32, i32
  }
  func.func @transform_6(%arg0: i32) -> (i32, i32) {
    %c0_i32 = arith.constant 0 : i32
    %c0_i32_0 = arith.constant 0 : i32
    %c0_i32_1 = arith.constant 0 : i32
    return %c0_i32, %c0_i32_0 : i32, i32
  }
  func.func @transform_7(%arg0: i32) -> (i32, i32) {
    %c0_i32 = arith.constant 0 : i32
    %c0_i32_0 = arith.constant 0 : i32
    return %arg0, %c0_i32 : i32, i32
  }
}

</mosaic_0001>

<llo_original>
// kernel: tpu_custom_call.1
$region0: #{tpu_custom_call.1}
  #allocation0 [shape = 'u32[]', space=smem, size = 0x4, offset = 0x4, fixed_abs, tag = 'smem constant byte address 0x4 - core index']
  #allocation1 [shape = 'u32[144,128]{1,0:T(1,128)}', space=vmem, size = 0x12000, scoped, tag = 'internal scratch']
  #allocation2 [shape = 'f32[1,1]{1,0:T(1,128)S(1)}', space=vmem, size = 0x200, scoped, tag = 'scoped memory for tpu_custom_call.1']
  %s0 = inlined_call_operand.hbm [shape: f32[16,384], index: 0, kind: input, shape index: {}]
  %s1 = inlined_call_operand.hbm [shape: bf16[384,768], index: 1, kind: input, shape index: {}]
  %s2 = inlined_call_operand.hbm [shape: f32[1,768], index: 2, kind: input, shape index: {}]
  %s3 = inlined_call_operand.hbm [shape: bf16[768,768], index: 3, kind: input, shape index: {}]
  %s4 = inlined_call_operand.hbm [shape: f32[1,768], index: 4, kind: input, shape index: {}]
  %s5 = inlined_call_operand.hbm [shape: f32[1,768], index: 5, kind: input, shape index: {}]
  %s6 = inlined_call_operand.<no memory space> [shape: f32[1,1], index: 6, kind: input, shape index: {}]
  %s7 = inlined_call_operand.vmem [shape: f32[16,1], index: 7, kind: output, shape index: {}]
  %s8 = sld [smem:[#allocation0]]
  $region62: #{tpu_custom_call.1} parent=0
    _
  %s10 = ssub.s32 1, %s8
  %s11 = scalar_select 0, %s10, %s8
  %v12 = vstv %s6
  %13 = vst [vmem:[#allocation2] sm:$0x1] %v12
  $region1: #{tpu_custom_call.1} parent=0
    #allocation3 [shape = 'u8[24576]{0}', space=vmem, size = 0x6000, scoped, tag = 'input window, operand 0, single buffered']
    #allocation4 [shape = 's32[1]{0}', space=sflag, size = 0x4, scoped, tag = 'scoped memory for tpu_custom_call.1']
    #allocation5 [shape = 'u8[589824]{0}', space=vmem, size = 0x90000, scoped, tag = 'input window, operand 1, single buffered']
    #allocation6 [shape = 's32[1]{0}', space=sflag, size = 0x4, scoped, tag = 'scoped memory for tpu_custom_call.1']
    #allocation7 [shape = 'u8[3072]{0}', space=vmem, size = 0xc00, scoped, tag = 'input window, operand 2, single buffered']
    #allocation8 [shape = 'u8[1179648]{0}', space=vmem, size = 0x120000, scoped, tag = 'input window, operand 3, single buffered']
    #allocation9 [shape = 's32[1]{0}', space=sflag, size = 0x4, scoped, tag = 'scoped memory for tpu_custom_call.1']
    #allocation10 [shape = 'u8[3072]{0}', space=vmem, size = 0xc00, scoped, tag = 'input window, operand 4, single buffered']
    #allocation11 [shape = 'u8[3072]{0}', space=vmem, size = 0xc00, scoped, tag = 'input window, operand 5, single buffered']
    #allocation12 [shape = 's32[1]{0}', space=sflag, size = 0x4, scoped, tag = 'scoped memory for tpu_custom_call.1']
    %14 = vsyncpa [#allocation4], 0
    %15 = vsyncpa [#allocation6], 0
    %16 = vsyncpa [#allocation9], 0
    %17 = vsyncpa [#allocation12], 0
    // Predicated region
    $region2: #{tpu_custom_call.1} parent=1 // pred_check
      _
    $region3: #{tpu_custom_call.1} parent=1 // pred_check_branch
      %19 = sbr.rel (0) target = $region5
    $region4: #{tpu_custom_call.1} parent=1 // pred_region
      %s21 = ssub.s32 768, 768
      %22 = vsyncadd [#allocation4], %s21
      %s23 = sshll.u32 [#allocation3], 4
      %s24 = int_to_ptr.vmem [resolvable:$true] %s23
      %29 = dma.hbm_to_vmem [thread:$0]  %s0, 768, %s24, [#allocation4], 384, 384, 24
    $region5: #{tpu_custom_call.1} parent=1 // pred_fallthru
      _
    // Predicated region
    $region6: #{tpu_custom_call.1} parent=1 // pred_check
      _
    $region7: #{tpu_custom_call.1} parent=1 // pred_check_branch
      %31 = sbr.rel (0) target = $region9
    $region8: #{tpu_custom_call.1} parent=1 // pred_region
      %s33 = ssub.s32 18432, 18432
      %34 = vsyncadd [#allocation6], %s33
      %s35 = sshll.u32 [#allocation5], 4
      %s36 = int_to_ptr.vmem [resolvable:$true] %s35
      %41 = dma.hbm_to_vmem [thread:$0]  %s1, 18432, %s36, [#allocation6], 384, 384, 24
    $region9: #{tpu_custom_call.1} parent=1 // pred_fallthru
      _
    // Predicated region
    $region10: #{tpu_custom_call.1} parent=1 // pred_check
      _
    $region11: #{tpu_custom_call.1} parent=1 // pred_check_branch
      %43 = sbr.rel (0) target = $region13
    $region12: #{tpu_custom_call.1} parent=1 // pred_region
      %s45 = ssub.s32 96, 96
      %46 = vsyncadd [#allocation6], %s45
      %s48 = sshll.u32 [#allocation7], 4
      %s49 = int_to_ptr.vmem [resolvable:$true] %s48
      %51 = dma.hbm_to_vmem [thread:$0]  %s2, 96, %s49, [#allocation6]
    $region13: #{tpu_custom_call.1} parent=1 // pred_fallthru
      _
    // Predicated region
    $region14: #{tpu_custom_call.1} parent=1 // pred_check
      _
    $region15: #{tpu_custom_call.1} parent=1 // pred_check_branch
      %53 = sbr.rel (0) target = $region17
    $region16: #{tpu_custom_call.1} parent=1 // pred_region
      %s55 = ssub.s32 36864, 36864
      %56 = vsyncadd [#allocation9], %s55
      %s57 = sshll.u32 [#allocation8], 4
      %s58 = int_to_ptr.vmem [resolvable:$true] %s57
      %63 = dma.hbm_to_vmem [thread:$0]  %s3, 36864, %s58, [#allocation9], 384, 384, 24
    $region17: #{tpu_custom_call.1} parent=1 // pred_fallthru
      _
    // Predicated region
    $region18: #{tpu_custom_call.1} parent=1 // pred_check
      _
    $region19: #{tpu_custom_call.1} parent=1 // pred_check_branch
      %65 = sbr.rel (0) target = $region21
    $region20: #{tpu_custom_call.1} parent=1 // pred_region
      %s67 = ssub.s32 96, 96
      %68 = vsyncadd [#allocation9], %s67
      %s70 = sshll.u32 [#allocation10], 4
      %s71 = int_to_ptr.vmem [resolvable:$true] %s70
      %73 = dma.hbm_to_vmem [thread:$0]  %s4, 96, %s71, [#allocation9]
    $region21: #{tpu_custom_call.1} parent=1 // pred_fallthru
      _
    // Predicated region
    $region22: #{tpu_custom_call.1} parent=1 // pred_check
      _
    $region23: #{tpu_custom_call.1} parent=1 // pred_check_branch
      %75 = sbr.rel (0) target = $region25
    $region24: #{tpu_custom_call.1} parent=1 // pred_region
      %s77 = ssub.s32 96, 96
      %78 = vsyncadd [#allocation12], %s77
      %s80 = sshll.u32 [#allocation11], 4
      %s81 = int_to_ptr.vmem [resolvable:$true] %s80
      %83 = dma.hbm_to_vmem [thread:$0]  %s5, 96, %s81, [#allocation12]
    $region25: #{tpu_custom_call.1} parent=1 // pred_fallthru
      _
    // Predicated region
    $region26: #{tpu_custom_call.1} parent=1 // pred_check
      _
    $region27: #{tpu_custom_call.1} parent=1 // pred_check_branch
      %85 = sbr.rel (0) target = $region29
    $region28: #{tpu_custom_call.1} parent=1 // pred_region
      _
    $region29: #{tpu_custom_call.1} parent=1 // pred_fallthru
      _
    // Predicated region
    $region30: #{tpu_custom_call.1} parent=1 // pred_check
      _
    $region31: #{tpu_custom_call.1} parent=1 // pred_check_branch
      %87 = sbr.rel (0) target = $region33
    $region32: #{tpu_custom_call.1} parent=1 // pred_region
      %88 = dma.done [#allocation4], 768
    $region33: #{tpu_custom_call.1} parent=1 // pred_fallthru
      _
    // Predicated region
    $region34: #{tpu_custom_call.1} parent=1 // pred_check
      _
    $region35: #{tpu_custom_call.1} parent=1 // pred_check_branch
      %90 = sbr.rel (0) target = $region37
    $region36: #{tpu_custom_call.1} parent=1 // pred_region
      %91 = dma.done [#allocation6], 18432
    $region37: #{tpu_custom_call.1} parent=1 // pred_fallthru
      _
    // Predicated region
    $region38: #{tpu_custom_call.1} parent=1 // pred_check
      _
    $region39: #{tpu_custom_call.1} parent=1 // pred_check_branch
      %93 = sbr.rel (0) target = $region41
    $region40: #{tpu_custom_call.1} parent=1 // pred_region
      %94 = dma.done [#allocation6], 96
    $region41: #{tpu_custom_call.1} parent=1 // pred_fallthru
      _
    // Predicated region
    $region42: #{tpu_custom_call.1} parent=1 // pred_check
      _
    $region43: #{tpu_custom_call.1} parent=1 // pred_check_branch
      %96 = sbr.rel (0) target = $region45
    $region44: #{tpu_custom_call.1} parent=1 // pred_region
      %97 = dma.done [#allocation9], 36864
    $region45: #{tpu_custom_call.1} parent=1 // pred_fallthru
      _
    // Predicated region
    $region46: #{tpu_custom_call.1} parent=1 // pred_check
      _
    $region47: #{tpu_custom_call.1} parent=1 // pred_check_branch
      %99 = sbr.rel (0) target = $region49
    $region48: #{tpu_custom_call.1} parent=1 // pred_region
      %100 = dma.done [#allocation9], 96
    $region49: #{tpu_custom_call.1} parent=1 // pred_fallthru
      _
    // Predicated region
    $region50: #{tpu_custom_call.1} parent=1 // pred_check
      _
    $region51: #{tpu_custom_call.1} parent=1 // pred_check_branch
      %102 = sbr.rel (0) target = $region53
    $region52: #{tpu_custom_call.1} parent=1 // pred_region
      %103 = dma.done [#allocation12], 96
    $region53: #{tpu_custom_call.1} parent=1 // pred_fallthru
      _
    %v105 = vld [vmem:[#allocation3] sm:$0xff]
    %v106 = vld [vmem:[#allocation3 + $0x8] sm:$0xff]
    %v107 = vld [vmem:[#allocation3 + $0x10] sm:$0xff]
    %v108 = vld [vmem:[#allocation3 + $0x18] sm:$0xff]
    %v109 = vld [vmem:[#allocation3 + $0x20] sm:$0xff]
    %v110 = vld [vmem:[#allocation3 + $0x28] sm:$0xff]
    %v111 = vpack.c.bf16 %v108, %v105
    %v112 = vpack.c.bf16 %v109, %v106
    %v113 = vpack.c.bf16 %v110, %v107
    %v114 = vld [vmem:[#allocation5] sm:$0xff]
    %v115 = vld [vmem:[#allocation5 + $0x8] sm:$0xff]
    %v116 = vld [vmem:[#allocation5 + $0x10] sm:$0xff]
    %v117 = vld [vmem:[#allocation5 + $0x18] sm:$0xff]
    %v118 = vld [vmem:[#allocation5 + $0x20] sm:$0xff]
    %v119 = vld [vmem:[#allocation5 + $0x28] sm:$0xff]
    %v120 = vld [vmem:[#allocation5 + $0x30] sm:$0xff]
    %v121 = vld [vmem:[#allocation5 + $0x38] sm:$0xff]
    %v122 = vld [vmem:[#allocation5 + $0x40] sm:$0xff]
    %v123 = vld [vmem:[#allocation5 + $0x48] sm:$0xff]
    %v124 = vld [vmem:[#allocation5 + $0x50] sm:$0xff]
    %v125 = vld [vmem:[#allocation5 + $0x58] sm:$0xff]
    %v126 = vld [vmem:[#allocation5 + $0x60] sm:$0xff]
    %v127 = vld [vmem:[#allocation5 + $0x68] sm:$0xff]
    %v128 = vld [vmem:[#allocation5 + $0x70] sm:$0xff]
    %v129 = vld [vmem:[#allocation5 + $0x78] sm:$0xff]
    %v130 = vld [vmem:[#allocation5 + $0x80] sm:$0xff]
    %v131 = vld [vmem:[#allocation5 + $0x88] sm:$0xff]
    %v132 = vld [vmem:[#allocation5 + $0x90] sm:$0xff]
    %v133 = vld [vmem:[#allocation5 + $0x98] sm:$0xff]
    %v134 = vld [vmem:[#allocation5 + $0xa0] sm:$0xff]
    %v135 = vld [vmem:[#allocation5 + $0xa8] sm:$0xff]
    %v136 = vld [vmem:[#allocation5 + $0xb0] sm:$0xff]
    %v137 = vld [vmem:[#allocation5 + $0xb8] sm:$0xff]
    %v138 = vld [vmem:[#allocation5 + $0xc0] sm:$0xff]
    %v139 = vld [vmem:[#allocation5 + $0xc8] sm:$0xff]
    %v140 = vld [vmem:[#allocation5 + $0xd0] sm:$0xff]
    %v141 = vld [vmem:[#allocation5 + $0xd8] sm:$0xff]
    %v142 = vld [vmem:[#allocation5 + $0xe0] sm:$0xff]
    %v143 = vld [vmem:[#allocation5 + $0xe8] sm:$0xff]
    %v144 = vld [vmem:[#allocation5 + $0xf0] sm:$0xff]
    %v145 = vld [vmem:[#allocation5 + $0xf8] sm:$0xff]
    %v146 = vld [vmem:[#allocation5 + $0x100] sm:$0xff]
    %v147 = vld [vmem:[#allocation5 + $0x108] sm:$0xff]
    %v148 = vld [vmem:[#allocation5 + $0x110] sm:$0xff]
    %v149 = vld [vmem:[#allocation5 + $0x118] sm:$0xff]
    %v150 = vld [vmem:[#allocation5 + $0x120] sm:$0xff]
    %v151 = vld [vmem:[#allocation5 + $0x128] sm:$0xff]
    %v152 = vld [vmem:[#allocation5 + $0x130] sm:$0xff]
    %v153 = vld [vmem:[#allocation5 + $0x138] sm:$0xff]
    %v154 = vld [vmem:[#allocation5 + $0x140] sm:$0xff]
    %v155 = vld [vmem:[#allocation5 + $0x148] sm:$0xff]
    %v156 = vld [vmem:[#allocation5 + $0x150] sm:$0xff]
    %v157 = vld [vmem:[#allocation5 + $0x158] sm:$0xff]
    %v158 = vld [vmem:[#allocation5 + $0x160] sm:$0xff]
    %v159 = vld [vmem:[#allocation5 + $0x168] sm:$0xff]
    %v160 = vld [vmem:[#allocation5 + $0x170] sm:$0xff]
    %v161 = vld [vmem:[#allocation5 + $0x178] sm:$0xff]
    %v162 = vld [vmem:[#allocation5 + $0x180] sm:$0xff]
    %v163 = vld [vmem:[#allocation5 + $0x188] sm:$0xff]
    %v164 = vld [vmem:[#allocation5 + $0x190] sm:$0xff]
    %v165 = vld [vmem:[#allocation5 + $0x198] sm:$0xff]
    %v166 = vld [vmem:[#allocation5 + $0x1a0] sm:$0xff]
    %v167 = vld [vmem:[#allocation5 + $0x1a8] sm:$0xff]
    %v168 = vld [vmem:[#allocation5 + $0x1b0] sm:$0xff]
    %v169 = vld [vmem:[#allocation5 + $0x1b8] sm:$0xff]
    %v170 = vld [vmem:[#allocation5 + $0x1c0] sm:$0xff]
    %v171 = vld [vmem:[#allocation5 + $0x1c8] sm:$0xff]
    %v172 = vld [vmem:[#allocation5 + $0x1d0] sm:$0xff]
    %v173 = vld [vmem:[#allocation5 + $0x1d8] sm:$0xff]
    %v174 = vld [vmem:[#allocation5 + $0x1e0] sm:$0xff]
    %v175 = vld [vmem:[#allocation5 + $0x1e8] sm:$0xff]
    %v176 = vld [vmem:[#allocation5 + $0x1f0] sm:$0xff]
    %v177 = vld [vmem:[#allocation5 + $0x1f8] sm:$0xff]
    %v178 = vld [vmem:[#allocation5 + $0x200] sm:$0xff]
    %v179 = vld [vmem:[#allocation5 + $0x208] sm:$0xff]
    %v180 = vld [vmem:[#allocation5 + $0x210] sm:$0xff]
    %v181 = vld [vmem:[#allocation5 + $0x218] sm:$0xff]
    %v182 = vld [vmem:[#allocation5 + $0x220] sm:$0xff]
    %v183 = vld [vmem:[#allocation5 + $0x228] sm:$0xff]
    %v184 = vld [vmem:[#allocation5 + $0x230] sm:$0xff]
    %v185 = vld [vmem:[#allocation5 + $0x238] sm:$0xff]
    %v186 = vld [vmem:[#allocation5 + $0x240] sm:$0xff]
    %v187 = vld [vmem:[#allocation5 + $0x248] sm:$0xff]
    %v188 = vld [vmem:[#allocation5 + $0x250] sm:$0xff]
    %v189 = vld [vmem:[#allocation5 + $0x258] sm:$0xff]
    %v190 = vld [vmem:[#allocation5 + $0x260] sm:$0xff]
    %v191 = vld [vmem:[#allocation5 + $0x268] sm:$0xff]
    %v192 = vld [vmem:[#allocation5 + $0x270] sm:$0xff]
    %v193 = vld [vmem:[#allocation5 + $0x278] sm:$0xff]
    %v194 = vld [vmem:[#allocation5 + $0x280] sm:$0xff]
    %v195 = vld [vmem:[#allocation5 + $0x288] sm:$0xff]
    %v196 = vld [vmem:[#allocation5 + $0x290] sm:$0xff]
    %v197 = vld [vmem:[#allocation5 + $0x298] sm:$0xff]
    %v198 = vld [vmem:[#allocation5 + $0x2a0] sm:$0xff]
    %v199 = vld [vmem:[#allocation5 + $0x2a8] sm:$0xff]
    %v200 = vld [vmem:[#allocation5 + $0x2b0] sm:$0xff]
    %v201 = vld [vmem:[#allocation5 + $0x2b8] sm:$0xff]
    %v202 = vld [vmem:[#allocation5 + $0x2c0] sm:$0xff]
    %v203 = vld [vmem:[#allocation5 + $0x2c8] sm:$0xff]
    %v204 = vld [vmem:[#allocation5 + $0x2d0] sm:$0xff]
    %v205 = vld [vmem:[#allocation5 + $0x2d8] sm:$0xff]
    %v206 = vld [vmem:[#allocation5 + $0x2e0] sm:$0xff]
    %v207 = vld [vmem:[#allocation5 + $0x2e8] sm:$0xff]
    %v208 = vld [vmem:[#allocation5 + $0x2f0] sm:$0xff]
    %v209 = vld [vmem:[#allocation5 + $0x2f8] sm:$0xff]
    %v210 = vld [vmem:[#allocation5 + $0x300] sm:$0xff]
    %v211 = vld [vmem:[#allocation5 + $0x308] sm:$0xff]
    %v212 = vld [vmem:[#allocation5 + $0x310] sm:$0xff]
    %v213 = vld [vmem:[#allocation5 + $0x318] sm:$0xff]
    %v214 = vld [vmem:[#allocation5 + $0x320] sm:$0xff]
    %v215 = vld [vmem:[#allocation5 + $0x328] sm:$0xff]
    %v216 = vld [vmem:[#allocation5 + $0x330] sm:$0xff]
    %v217 = vld [vmem:[#allocation5 + $0x338] sm:$0xff]
    %v218 = vld [vmem:[#allocation5 + $0x340] sm:$0xff]
    %v219 = vld [vmem:[#allocation5 + $0x348] sm:$0xff]
    %v220 = vld [vmem:[#allocation5 + $0x350] sm:$0xff]
    %v221 = vld [vmem:[#allocation5 + $0x358] sm:$0xff]
    %v222 = vld [vmem:[#allocation5 + $0x360] sm:$0xff]
    %v223 = vld [vmem:[#allocation5 + $0x368] sm:$0xff]
    %v224 = vld [vmem:[#allocation5 + $0x370] sm:$0xff]
    %v225 = vld [vmem:[#allocation5 + $0x378] sm:$0xff]
    %v226 = vld [vmem:[#allocation5 + $0x380] sm:$0xff]
    %v227 = vld [vmem:[#allocation5 + $0x388] sm:$0xff]
    %v228 = vld [vmem:[#allocation5 + $0x390] sm:$0xff]
    %v229 = vld [vmem:[#allocation5 + $0x398] sm:$0xff]
    %v230 = vld [vmem:[#allocation5 + $0x3a0] sm:$0xff]
    %v231 = vld [vmem:[#allocation5 + $0x3a8] sm:$0xff]
    %v232 = vld [vmem:[#allocation5 + $0x3b0] sm:$0xff]
    %v233 = vld [vmem:[#allocation5 + $0x3b8] sm:$0xff]
    %v234 = vld [vmem:[#allocation5 + $0x3c0] sm:$0xff]
    %v235 = vld [vmem:[#allocation5 + $0x3c8] sm:$0xff]
    %v236 = vld [vmem:[#allocation5 + $0x3d0] sm:$0xff]
    %v237 = vld [vmem:[#allocation5 + $0x3d8] sm:$0xff]
    %v238 = vld [vmem:[#allocation5 + $0x3e0] sm:$0xff]
    %v239 = vld [vmem:[#allocation5 + $0x3e8] sm:$0xff]
    %v240 = vld [vmem:[#allocation5 + $0x3f0] sm:$0xff]
    %v241 = vld [vmem:[#allocation5 + $0x3f8] sm:$0xff]
    %v242 = vld [vmem:[#allocation5 + $0x400] sm:$0xff]
    %v243 = vld [vmem:[#allocation5 + $0x408] sm:$0xff]
    %v244 = vld [vmem:[#allocation5 + $0x410] sm:$0xff]
    %v245 = vld [vmem:[#allocation5 + $0x418] sm:$0xff]
    %v246 = vld [vmem:[#allocation5 + $0x420] sm:$0xff]
    %v247 = vld [vmem:[#allocation5 + $0x428] sm:$0xff]
    %v248 = vld [vmem:[#allocation5 + $0x430] sm:$0xff]
    %v249 = vld [vmem:[#allocation5 + $0x438] sm:$0xff]
    %v250 = vld [vmem:[#allocation5 + $0x440] sm:$0xff]
    %v251 = vld [vmem:[#allocation5 + $0x448] sm:$0xff]
    %v252 = vld [vmem:[#allocation5 + $0x450] sm:$0xff]
    %v253 = vld [vmem:[#allocation5 + $0x458] sm:$0xff]
    %v254 = vld [vmem:[#allocation5 + $0x460] sm:$0xff]
    %v255 = vld [vmem:[#allocation5 + $0x468] sm:$0xff]
    %v256 = vld [vmem:[#allocation5 + $0x470] sm:$0xff]
    %v257 = vld [vmem:[#allocation5 + $0x478] sm:$0xff]
    %v258 = vld [vmem:[#allocation7] sm:$0x3f]
    %v260 = vlaneseq
    %v261 = vshrl.u32 %v260, 7
    %v262 = vsub.s32 0, %v261
    %v263 = vrot.slane %v258, %v262
    %v264 = vlaneseq
    %v265 = vshrl.u32 %v264, 7
    %v266 = vsub.s32 1, %v265
    %v267 = vrot.slane %v258, %v266
    %v268 = vlaneseq
    %v269 = vshrl.u32 %v268, 7
    %v270 = vsub.s32 2, %v269
    %v271 = vrot.slane %v258, %v270
    %v272 = vlaneseq
    %v273 = vshrl.u32 %v272, 7
    %v274 = vsub.s32 3, %v273
    %v275 = vrot.slane %v258, %v274
    %v276 = vlaneseq
    %v277 = vshrl.u32 %v276, 7
    %v278 = vsub.s32 4, %v277
    %v279 = vrot.slane %v258, %v278
    %v280 = vlaneseq
    %v281 = vshrl.u32 %v280, 7
    %v282 = vsub.s32 5, %v281
    %v283 = vrot.slane %v258, %v282
    %v434 = vunpack.c.l.b16 %v114
    %v435 = vunpack.c.h.b16 %v114
    %v436 = vunpack.c.l.b16 %v115
    %v437 = vunpack.c.h.b16 %v115
    %v438 = vunpack.c.l.b16 %v116
    %v439 = vunpack.c.h.b16 %v116
    %v440 = vunpack.c.l.b16 %v117
    %v441 = vunpack.c.h.b16 %v117
    %v442 = vunpack.c.l.b16 %v118
    %v443 = vunpack.c.h.b16 %v118
    %v444 = vunpack.c.l.b16 %v119
    %v445 = vunpack.c.h.b16 %v119
    %v446 = vunpack.c.l.b16 %v120
    %v447 = vunpack.c.h.b16 %v120
    %v448 = vunpack.c.l.b16 %v121
    %v449 = vunpack.c.h.b16 %v121
    %v450 = vunpack.c.l.b16 %v122
    %v451 = vunpack.c.h.b16 %v122
    %v452 = vunpack.c.l.b16 %v123
    %v453 = vunpack.c.h.b16 %v123
    %v454 = vunpack.c.l.b16 %v124
    %v455 = vunpack.c.h.b16 %v124
    %v456 = vunpack.c.l.b16 %v125
    %v457 = vunpack.c.h.b16 %v125
    %v458 = vunpack.c.l.b16 %v126
    %v459 = vunpack.c.h.b16 %v126
    %v460 = vunpack.c.l.b16 %v127
    %v461 = vunpack.c.h.b16 %v127
    %v462 = vunpack.c.l.b16 %v128
    %v463 = vunpack.c.h.b16 %v128
    %v464 = vunpack.c.l.b16 %v129
    %v465 = vunpack.c.h.b16 %v129
    %v466 = vunpack.c.l.b16 %v130
    %v467 = vunpack.c.h.b16 %v130
    %v468 = vunpack.c.l.b16 %v131
    %v469 = vunpack.c.h.b16 %v131
    %v470 = vunpack.c.l.b16 %v132
    %v471 = vunpack.c.h.b16 %v132
    %v472 = vunpack.c.l.b16 %v133
    %v473 = vunpack.c.h.b16 %v133
    %v474 = vunpack.c.l.b16 %v134
    %v475 = vunpack.c.h.b16 %v134
    %v476 = vunpack.c.l.b16 %v135
    %v477 = vunpack.c.h.b16 %v135
    %v478 = vunpack.c.l.b16 %v136
    %v479 = vunpack.c.h.b16 %v136
    %v480 = vunpack.c.l.b16 %v137
    %v481 = vunpack.c.h.b16 %v137
    %v482 = vunpack.c.l.b16 %v138
    %v483 = vunpack.c.h.b16 %v138
    %v484 = vunpack.c.l.b16 %v139
    %v485 = vunpack.c.h.b16 %v139
    %v486 = vunpack.c.l.b16 %v140
    %v487 = vunpack.c.h.b16 %v140
    %v488 = vunpack.c.l.b16 %v141
    %v489 = vunpack.c.h.b16 %v141
    %v490 = vunpack.c.l.b16 %v142
    %v491 = vunpack.c.h.b16 %v142
    %v492 = vunpack.c.l.b16 %v143
    %v493 = vunpack.c.h.b16 %v143
    %v494 = vunpack.c.l.b16 %v144
    %v495 = vunpack.c.h.b16 %v144
    %v496 = vunpack.c.l.b16 %v145
    %v497 = vunpack.c.h.b16 %v145
    %v498 = vunpack.c.l.b16 %v146
    %v499 = vunpack.c.h.b16 %v146
    %v500 = vunpack.c.l.b16 %v147
    %v501 = vunpack.c.h.b16 %v147
    %v502 = vunpack.c.l.b16 %v148
    %v503 = vunpack.c.h.b16 %v148
    %v504 = vunpack.c.l.b16 %v149
    %v505 = vunpack.c.h.b16 %v149
    %v506 = vunpack.c.l.b16 %v150
    %v507 = vunpack.c.h.b16 %v150
    %v508 = vunpack.c.l.b16 %v151
    %v509 = vunpack.c.h.b16 %v151
    %v510 = vunpack.c.l.b16 %v152
    %v511 = vunpack.c.h.b16 %v152
    %v512 = vunpack.c.l.b16 %v153
    %v513 = vunpack.c.h.b16 %v153
    %v514 = vunpack.c.l.b16 %v154
    %v515 = vunpack.c.h.b16 %v154
    %v516 = vunpack.c.l.b16 %v155
    %v517 = vunpack.c.h.b16 %v155
    %v518 = vunpack.c.l.b16 %v156
    %v519 = vunpack.c.h.b16 %v156
    %v520 = vunpack.c.l.b16 %v157
    %v521 = vunpack.c.h.b16 %v157
    %v522 = vunpack.c.l.b16 %v158
    %v523 = vunpack.c.h.b16 %v158
    %v524 = vunpack.c.l.b16 %v159
    %v525 = vunpack.c.h.b16 %v159
    %v526 = vunpack.c.l.b16 %v160
    %v527 = vunpack.c.h.b16 %v160
    %v528 = vunpack.c.l.b16 %v161
    %v529 = vunpack.c.h.b16 %v161
    %v530 = vunpack.c.l.b16 %v162
    %v531 = vunpack.c.h.b16 %v162
    %v532 = vunpack.c.l.b16 %v163
    %v533 = vunpack.c.h.b16 %v163
    %v534 = vunpack.c.l.b16 %v164
    %v535 = vunpack.c.h.b16 %v164
    %v536 = vunpack.c.l.b16 %v165
    %v537 = vunpack.c.h.b16 %v165
    %v538 = vunpack.c.l.b16 %v166
    %v539 = vunpack.c.h.b16 %v166
    %v540 = vunpack.c.l.b16 %v167
    %v541 = vunpack.c.h.b16 %v167
    %v542 = vunpack.c.l.b16 %v168
    %v543 = vunpack.c.h.b16 %v168
    %v544 = vunpack.c.l.b16 %v169
    %v545 = vunpack.c.h.b16 %v169
    %v546 = vunpack.c.l.b16 %v170
    %v547 = vunpack.c.h.b16 %v170
    %v548 = vunpack.c.l.b16 %v171
    %v549 = vunpack.c.h.b16 %v171
    %v550 = vunpack.c.l.b16 %v172
    %v551 = vunpack.c.h.b16 %v172
    %v552 = vunpack.c.l.b16 %v173
    %v553 = vunpack.c.h.b16 %v173
    %v554 = vunpack.c.l.b16 %v174
    %v555 = vunpack.c.h.b16 %v174
    %v556 = vunpack.c.l.b16 %v175
    %v557 = vunpack.c.h.b16 %v175
    %v558 = vunpack.c.l.b16 %v176
    %v559 = vunpack.c.h.b16 %v176
    %v560 = vunpack.c.l.b16 %v177
    %v561 = vunpack.c.h.b16 %v177
    %v562 = vunpack.c.l.b16 %v178
    %v563 = vunpack.c.h.b16 %v178
    %v564 = vunpack.c.l.b16 %v179
    %v565 = vunpack.c.h.b16 %v179
    %v566 = vunpack.c.l.b16 %v180
    %v567 = vunpack.c.h.b16 %v180
    %v568 = vunpack.c.l.b16 %v181
    %v569 = vunpack.c.h.b16 %v181
    %v570 = vunpack.c.l.b16 %v182
    %v571 = vunpack.c.h.b16 %v182
    %v572 = vunpack.c.l.b16 %v183
    %v573 = vunpack.c.h.b16 %v183
    %v574 = vunpack.c.l.b16 %v184
    %v575 = vunpack.c.h.b16 %v184
    %v576 = vunpack.c.l.b16 %v185
    %v577 = vunpack.c.h.b16 %v185
    %v578 = vunpack.c.l.b16 %v186
    %v579 = vunpack.c.h.b16 %v186
    %v580 = vunpack.c.l.b16 %v187
    %v581 = vunpack.c.h.b16 %v187
    %v582 = vunpack.c.l.b16 %v188
    %v583 = vunpack.c.h.b16 %v188
    %v584 = vunpack.c.l.b16 %v189
    %v585 = vunpack.c.h.b16 %v189
    %v586 = vunpack.c.l.b16 %v190
    %v587 = vunpack.c.h.b16 %v190
    %v588 = vunpack.c.l.b16 %v191
    %v589 = vunpack.c.h.b16 %v191
    %v590 = vunpack.c.l.b16 %v192
    %v591 = vunpack.c.h.b16 %v192
    %v592 = vunpack.c.l.b16 %v193
    %v593 = vunpack.c.h.b16 %v193
    %v594 = vunpack.c.l.b16 %v194
    %v595 = vunpack.c.h.b16 %v194
    %v596 = vunpack.c.l.b16 %v195
    %v597 = vunpack.c.h.b16 %v195
    %v598 = vunpack.c.l.b16 %v196
    %v599 = vunpack.c.h.b16 %v196
    %v600 = vunpack.c.l.b16 %v197
    %v601 = vunpack.c.h.b16 %v197
    %v602 = vunpack.c.l.b16 %v198
    %v603 = vunpack.c.h.b16 %v198
    %v604 = vunpack.c.l.b16 %v199
    %v605 = vunpack.c.h.b16 %v199
    %v606 = vunpack.c.l.b16 %v200
    %v607 = vunpack.c.h.b16 %v200
    %v608 = vunpack.c.l.b16 %v201
    %v609 = vunpack.c.h.b16 %v201
    %v610 = vunpack.c.l.b16 %v202
    %v611 = vunpack.c.h.b16 %v202
    %v612 = vunpack.c.l.b16 %v203
    %v613 = vunpack.c.h.b16 %v203
    %v614 = vunpack.c.l.b16 %v204
    %v615 = vunpack.c.h.b16 %v204
    %v616 = vunpack.c.l.b16 %v205
    %v617 = vunpack.c.h.b16 %v205
    %v618 = vunpack.c.l.b16 %v206
    %v619 = vunpack.c.h.b16 %v206
    %v620 = vunpack.c.l.b16 %v207
    %v621 = vunpack.c.h.b16 %v207
    %v622 = vunpack.c.l.b16 %v208
    %v623 = vunpack.c.h.b16 %v208
    %v624 = vunpack.c.l.b16 %v209
    %v625 = vunpack.c.h.b16 %v209
    %v626 = vunpack.c.l.b16 %v210
    %v627 = vunpack.c.h.b16 %v210
    %v628 = vunpack.c.l.b16 %v211
    %v629 = vunpack.c.h.b16 %v211
    %v630 = vunpack.c.l.b16 %v212
    %v631 = vunpack.c.h.b16 %v212
    %v632 = vunpack.c.l.b16 %v213
    %v633 = vunpack.c.h.b16 %v213
    %v634 = vunpack.c.l.b16 %v214
    %v635 = vunpack.c.h.b16 %v214
    %v636 = vunpack.c.l.b16 %v215
    %v637 = vunpack.c.h.b16 %v215
    %v638 = vunpack.c.l.b16 %v216
    %v639 = vunpack.c.h.b16 %v216
    %v640 = vunpack.c.l.b16 %v217
    %v641 = vunpack.c.h.b16 %v217
    %v642 = vunpack.c.l.b16 %v218
    %v643 = vunpack.c.h.b16 %v218
    %v644 = vunpack.c.l.b16 %v219
    %v645 = vunpack.c.h.b16 %v219
    %v646 = vunpack.c.l.b16 %v220
    %v647 = vunpack.c.h.b16 %v220
    %v648 = vunpack.c.l.b16 %v221
    %v649 = vunpack.c.h.b16 %v221
    %v650 = vunpack.c.l.b16 %v222
    %v651 = vunpack.c.h.b16 %v222
    %v652 = vunpack.c.l.b16 %v223
    %v653 = vunpack.c.h.b16 %v223
    %v654 = vunpack.c.l.b16 %v224
    %v655 = vunpack.c.h.b16 %v224
    %v656 = vunpack.c.l.b16 %v225
    %v657 = vunpack.c.h.b16 %v225
    %v658 = vunpack.c.l.b16 %v226
    %v659 = vunpack.c.h.b16 %v226
    %v660 = vunpack.c.l.b16 %v227
    %v661 = vunpack.c.h.b16 %v227
    %v662 = vunpack.c.l.b16 %v228
    %v663 = vunpack.c.h.b16 %v228
    %v664 = vunpack.c.l.b16 %v229
    %v665 = vunpack.c.h.b16 %v229
    %v666 = vunpack.c.l.b16 %v230
    %v667 = vunpack.c.h.b16 %v230
    %v668 = vunpack.c.l.b16 %v231
    %v669 = vunpack.c.h.b16 %v231
    %v670 = vunpack.c.l.b16 %v232
    %v671 = vunpack.c.h.b16 %v232
    %v672 = vunpack.c.l.b16 %v233
    %v673 = vunpack.c.h.b16 %v233
    %v674 = vunpack.c.l.b16 %v234
    %v675 = vunpack.c.h.b16 %v234
    %v676 = vunpack.c.l.b16 %v235
    %v677 = vunpack.c.h.b16 %v235
    %v678 = vunpack.c.l.b16 %v236
    %v679 = vunpack.c.h.b16 %v236
    %v680 = vunpack.c.l.b16 %v237
    %v681 = vunpack.c.h.b16 %v237
    %v682 = vunpack.c.l.b16 %v238
    %v683 = vunpack.c.h.b16 %v238
    %v684 = vunpack.c.l.b16 %v239
    %v685 = vunpack.c.h.b16 %v239
    %v686 = vunpack.c.l.b16 %v240
    %v687 = vunpack.c.h.b16 %v240
    %v688 = vunpack.c.l.b16 %v241
    %v689 = vunpack.c.h.b16 %v241
    %v690 = vunpack.c.l.b16 %v242
    %v691 = vunpack.c.h.b16 %v242
    %v692 = vunpack.c.l.b16 %v243
    %v693 = vunpack.c.h.b16 %v243
    %v694 = vunpack.c.l.b16 %v244
    %v695 = vunpack.c.h.b16 %v244
    %v696 = vunpack.c.l.b16 %v245
    %v697 = vunpack.c.h.b16 %v245
    %v698 = vunpack.c.l.b16 %v246
    %v699 = vunpack.c.h.b16 %v246
    %v700 = vunpack.c.l.b16 %v247
    %v701 = vunpack.c.h.b16 %v247
    %v702 = vunpack.c.l.b16 %v248
    %v703 = vunpack.c.h.b16 %v248
    %v704 = vunpack.c.l.b16 %v249
    %v705 = vunpack.c.h.b16 %v249
    %v706 = vunpack.c.l.b16 %v250
    %v707 = vunpack.c.h.b16 %v250
    %v708 = vunpack.c.l.b16 %v251
    %v709 = vunpack.c.h.b16 %v251
    %v710 = vunpack.c.l.b16 %v252
    %v711 = vunpack.c.h.b16 %v252
    %v712 = vunpack.c.l.b16 %v253
    %v713 = vunpack.c.h.b16 %v253
    %v714 = vunpack.c.l.b16 %v254
    %v715 = vunpack.c.h.b16 %v254
    %v716 = vunpack.c.l.b16 %v255
    %v717 = vunpack.c.h.b16 %v255
    %v718 = vunpack.c.l.b16 %v256
    %v719 = vunpack.c.h.b16 %v256
    %v720 = vunpack.c.l.b16 %v257
    %v721 = vunpack.c.h.b16 %v257
    %v722 = vpack.c.b16 %v440, %v434
    %v723 = vpack.c.b16 %v441, %v435
    %v724 = vpack.c.b16 %v442, %v436
    %v725 = vpack.c.b16 %v443, %v437
    %v726 = vpack.c.b16 %v444, %v438
    %v727 = vpack.c.b16 %v445, %v439
    %v728 = vpack.c.b16 %v452, %v446
    %v729 = vpack.c.b16 %v453, %v447
    %v730 = vpack.c.b16 %v454, %v448
    %v731 = vpack.c.b16 %v455, %v449
    %v732 = vpack.c.b16 %v456, %v450
    %v733 = vpack.c.b16 %v457, %v451
    %v734 = vpack.c.b16 %v464, %v458
    %v735 = vpack.c.b16 %v465, %v459
    %v736 = vpack.c.b16 %v466, %v460
    %v737 = vpack.c.b16 %v467, %v461
    %v738 = vpack.c.b16 %v468, %v462
    %v739 = vpack.c.b16 %v469, %v463
    %v740 = vpack.c.b16 %v476, %v470
    %v741 = vpack.c.b16 %v477, %v471
    %v742 = vpack.c.b16 %v478, %v472
    %v743 = vpack.c.b16 %v479, %v473
    %v744 = vpack.c.b16 %v480, %v474
    %v745 = vpack.c.b16 %v481, %v475
    %v746 = vpack.c.b16 %v488, %v482
    %v747 = vpack.c.b16 %v489, %v483
    %v748 = vpack.c.b16 %v490, %v484
    %v749 = vpack.c.b16 %v491, %v485
    %v750 = vpack.c.b16 %v492, %v486
    %v751 = vpack.c.b16 %v493, %v487
    %v752 = vpack.c.b16 %v500, %v494
    %v753 = vpack.c.b16 %v501, %v495
    %v754 = vpack.c.b16 %v502, %v496
    %v755 = vpack.c.b16 %v503, %v497
    %v756 = vpack.c.b16 %v504, %v498
    %v757 = vpack.c.b16 %v505, %v499
    %v758 = vpack.c.b16 %v512, %v506
    %v759 = vpack.c.b16 %v513, %v507
    %v760 = vpack.c.b16 %v514, %v508
    %v761 = vpack.c.b16 %v515, %v509
    %v762 = vpack.c.b16 %v516, %v510
    %v763 = vpack.c.b16 %v517, %v511
    %v764 = vpack.c.b16 %v524, %v518
    %v765 = vpack.c.b16 %v525, %v519
    %v766 = vpack.c.b16 %v526, %v520
    %v767 = vpack.c.b16 %v527, %v521
    %v768 = vpack.c.b16 %v528, %v522
    %v769 = vpack.c.b16 %v529, %v523
    %v770 = vpack.c.b16 %v536, %v530
    %v771 = vpack.c.b16 %v537, %v531
    %v772 = vpack.c.b16 %v538, %v532
    %v773 = vpack.c.b16 %v539, %v533
    %v774 = vpack.c.b16 %v540, %v534
    %v775 = vpack.c.b16 %v541, %v535
    %v776 = vpack.c.b16 %v548, %v542
    %v777 = vpack.c.b16 %v549, %v543
    %v778 = vpack.c.b16 %v550, %v544
    %v779 = vpack.c.b16 %v551, %v545
    %v780 = vpack.c.b16 %v552, %v546
    %v781 = vpack.c.b16 %v553, %v547
    %v782 = vpack.c.b16 %v560, %v554
    %v783 = vpack.c.b16 %v561, %v555
    %v784 = vpack.c.b16 %v562, %v556
    %v785 = vpack.c.b16 %v563, %v557
    %v786 = vpack.c.b16 %v564, %v558
    %v787 = vpack.c.b16 %v565, %v559
    %v788 = vpack.c.b16 %v572, %v566
    %v789 = vpack.c.b16 %v573, %v567
    %v790 = vpack.c.b16 %v574, %v568
    %v791 = vpack.c.b16 %v575, %v569
    %v792 = vpack.c.b16 %v576, %v570
    %v793 = vpack.c.b16 %v577, %v571
    %v794 = vpack.c.b16 %v584, %v578
    %v795 = vpack.c.b16 %v585, %v579
    %v796 = vpack.c.b16 %v586, %v580
    %v797 = vpack.c.b16 %v587, %v581
    %v798 = vpack.c.b16 %v588, %v582
    %v799 = vpack.c.b16 %v589, %v583
    %v800 = vpack.c.b16 %v596, %v590
    %v801 = vpack.c.b16 %v597, %v591
    %v802 = vpack.c.b16 %v598, %v592
    %v803 = vpack.c.b16 %v599, %v593
    %v804 = vpack.c.b16 %v600, %v594
    %v805 = vpack.c.b16 %v601, %v595
    %v806 = vpack.c.b16 %v608, %v602
    %v807 = vpack.c.b16 %v609, %v603
    %v808 = vpack.c.b16 %v610, %v604
    %v809 = vpack.c.b16 %v611, %v605
    %v810 = vpack.c.b16 %v612, %v606
    %v811 = vpack.c.b16 %v613, %v607
    %v812 = vpack.c.b16 %v620, %v614
    %v813 = vpack.c.b16 %v621, %v615
    %v814 = vpack.c.b16 %v622, %v616
    %v815 = vpack.c.b16 %v623, %v617
    %v816 = vpack.c.b16 %v624, %v618
    %v817 = vpack.c.b16 %v625, %v619
    %v818 = vpack.c.b16 %v632, %v626
    %v819 = vpack.c.b16 %v633, %v627
    %v820 = vpack.c.b16 %v634, %v628
    %v821 = vpack.c.b16 %v635, %v629
    %v822 = vpack.c.b16 %v636, %v630
    %v823 = vpack.c.b16 %v637, %v631
    %v824 = vpack.c.b16 %v644, %v638
    %v825 = vpack.c.b16 %v645, %v639
    %v826 = vpack.c.b16 %v646, %v640
    %v827 = vpack.c.b16 %v647, %v641
    %v828 = vpack.c.b16 %v648, %v642
    %v829 = vpack.c.b16 %v649, %v643
    %v830 = vpack.c.b16 %v656, %v650
    %v831 = vpack.c.b16 %v657, %v651
    %v832 = vpack.c.b16 %v658, %v652
    %v833 = vpack.c.b16 %v659, %v653
    %v834 = vpack.c.b16 %v660, %v654
    %v835 = vpack.c.b16 %v661, %v655
    %v836 = vpack.c.b16 %v668, %v662
    %v837 = vpack.c.b16 %v669, %v663
    %v838 = vpack.c.b16 %v670, %v664
    %v839 = vpack.c.b16 %v671, %v665
    %v840 = vpack.c.b16 %v672, %v666
    %v841 = vpack.c.b16 %v673, %v667
    %v842 = vpack.c.b16 %v680, %v674
    %v843 = vpack.c.b16 %v681, %v675
    %v844 = vpack.c.b16 %v682, %v676
    %v845 = vpack.c.b16 %v683, %v677
    %v846 = vpack.c.b16 %v684, %v678
    %v847 = vpack.c.b16 %v685, %v679
    %v848 = vpack.c.b16 %v692, %v686
    %v849 = vpack.c.b16 %v693, %v687
    %v850 = vpack.c.b16 %v694, %v688
    %v851 = vpack.c.b16 %v695, %v689
    %v852 = vpack.c.b16 %v696, %v690
    %v853 = vpack.c.b16 %v697, %v691
    %v854 = vpack.c.b16 %v704, %v698
    %v855 = vpack.c.b16 %v705, %v699
    %v856 = vpack.c.b16 %v706, %v700
    %v857 = vpack.c.b16 %v707, %v701
    %v858 = vpack.c.b16 %v708, %v702
    %v859 = vpack.c.b16 %v709, %v703
    %v860 = vpack.c.b16 %v716, %v710
    %v861 = vpack.c.b16 %v717, %v711
    %v862 = vpack.c.b16 %v718, %v712
    %v863 = vpack.c.b16 %v719, %v713
    %v864 = vpack.c.b16 %v720, %v714
    %v865 = vpack.c.b16 %v721, %v715
    %1010 = vmatprep.subr.bf16.mxu0 %v723
    %1011 = vmatpush1.bf16.msra.mxu0 %v722
    %1012 = vmatprep.subr.bf16.mxu0 %v729
    %1013 = vmatpush1.bf16.msra.mxu0 %v728
    %1014 = vmatprep.subr.bf16.mxu0 %v735
    %1015 = vmatpush1.bf16.msra.mxu0 %v734
    %1016 = vmatprep.subr.bf16.mxu0 %v741
    %1017 = vmatpush1.bf16.msra.mxu0 %v740
    %1018 = vmatprep.subr.bf16.mxu0 %v747
    %1019 = vmatpush1.bf16.msra.mxu0 %v746
    %1020 = vmatprep.subr.bf16.mxu0 %v753
    %1021 = vmatpush1.bf16.msra.mxu0 %v752
    %1022 = vmatprep.subr.bf16.mxu0 %v759
    %1023 = vmatpush1.bf16.msra.mxu0 %v758
    %1024 = vmatprep.subr.bf16.mxu0 %v765
    %1025 = vmatpush1.bf16.msra.mxu0 %v764
    %1026 = vmatprep.subr.bf16.mxu0 %v771
    %1027 = vmatpush1.bf16.msra.mxu0 %v770
    %1028 = vmatprep.subr.bf16.mxu0 %v777
    %1029 = vmatpush1.bf16.msra.mxu0 %v776
    %1030 = vmatprep.subr.bf16.mxu0 %v783
    %1031 = vmatpush1.bf16.msra.mxu0 %v782
    %1032 = vmatprep.subr.bf16.mxu0 %v789
    %1033 = vmatpush1.bf16.msra.mxu0 %v788
    %1034 = vmatprep.subr.bf16.mxu0 %v795
    %1035 = vmatpush1.bf16.msra.mxu0 %v794
    %1036 = vmatprep.subr.bf16.mxu0 %v801
    %1037 = vmatpush1.bf16.msra.mxu0 %v800
    %1038 = vmatprep.subr.bf16.mxu0 %v807
    %1039 = vmatpush1.bf16.msra.mxu0 %v806
    %1040 = vmatprep.subr.bf16.mxu0 %v813
    %1041 = vmatpush1.bf16.msra.mxu0 %v812
    %1042 = vmatprep.mubr.bf16.mxu0 %v112
    %1043 = vmatmul.mubr.bf16.gmra.mrb[0].mxu0 %v111
    %v1044 = vpop.f32.mrb[0].mxu0
    %v1045 = vadd.f32 %v263, %v1044
    %v1046 = vpop.f32.mrb[0].mxu0
    %v1047 = vadd.f32 %v267, %v1046
    %v1048 = vpop.f32.mrb[0].mxu0
    %v1049 = vadd.f32 %v263, %v1048
    %v1050 = vpop.f32.mrb[0].mxu0
    %v1051 = vadd.f32 %v267, %v1050
    %1052 = vdwg.mxu0
    %1053 = vmatprep.subr.bf16.mxu0 %v819
    %1054 = vmatpush1.bf16.msra.mxu0 %v818
    %1055 = vmatprep.subr.bf16.mxu0 %v825
    %1056 = vmatpush1.bf16.msra.mxu0 %v824
    %1057 = vmatprep.subr.bf16.mxu0 %v831
    %1058 = vmatpush1.bf16.msra.mxu0 %v830
    %1059 = vmatprep.subr.bf16.mxu0 %v837
    %1060 = vmatpush1.bf16.msra.mxu0 %v836
    %1061 = vmatprep.subr.bf16.mxu0 %v843
    %1062 = vmatpush1.bf16.msra.mxu0 %v842
    %1063 = vmatprep.subr.bf16.mxu0 %v849
    %1064 = vmatpush1.bf16.msra.mxu0 %v848
    %1065 = vmatprep.subr.bf16.mxu0 %v855
    %1066 = vmatpush1.bf16.msra.mxu0 %v854
    %1067 = vmatprep.subr.bf16.mxu0 %v861
    %1068 = vmatpush1.bf16.msra.mxu0 %v860
    %1069 = vmatprep.subr.bf16.mxu0 0
    %1070 = vmatpush1.bf16.msra.mxu0 0
    %1071 = vmatprep.subr.bf16.mxu0 0
    %1072 = vmatpush1.bf16.msra.mxu0 0
    %1073 = vmatprep.subr.bf16.mxu0 0
    %1074 = vmatpush1.bf16.msra.mxu0 0
    %1075 = vmatprep.subr.bf16.mxu0 0
    %1076 = vmatpush1.bf16.msra.mxu0 0
    %1077 = vmatprep.subr.bf16.mxu0 0
    %1078 = vmatpush1.bf16.msra.mxu0 0
    %1079 = vmatprep.subr.bf16.mxu0 0
    %1080 = vmatpush1.bf16.msra.mxu0 0
    %1081 = vmatprep.subr.bf16.mxu0 0
    %1082 = vmatpush1.bf16.msra.mxu0 0
    %1083 = vmatprep.subr.bf16.mxu0 0
    %1084 = vmatpush1.bf16.msra.mxu0 0
    %1085 = vmatprep.mubr.bf16.mxu0 0
    %1086 = vmatmul.mubr.bf16.gmra.mrb[0].mxu0 %v113
    %v1087 = vpop.f32.mrb[0].mxu0
    %v1088 = vadd.f32 %v1045, %v1087
    %v1089 = vpop.f32.mrb[0].mxu0
    %v1090 = vadd.f32 %v1047, %v1089
    %v1091 = vpop.f32.mrb[0].mxu0
    %v1092 = vadd.f32 %v1049, %v1091
    %v1093 = vpop.f32.mrb[0].mxu0
    %v1094 = vadd.f32 %v1051, %v1093
    %1095 = vdwg.mxu0
    %1096 = vmatprep.subr.bf16.mxu0 %v725
    %1097 = vmatpush1.bf16.msra.mxu0 %v724
    %1098 = vmatprep.subr.bf16.mxu0 %v731
    %1099 = vmatpush1.bf16.msra.mxu0 %v730
    %1100 = vmatprep.subr.bf16.mxu0 %v737
    %1101 = vmatpush1.bf16.msra.mxu0 %v736
    %1102 = vmatprep.subr.bf16.mxu0 %v743
    %1103 = vmatpush1.bf16.msra.mxu0 %v742
    %1104 = vmatprep.subr.bf16.mxu0 %v749
    %1105 = vmatpush1.bf16.msra.mxu0 %v748
    %1106 = vmatprep.subr.bf16.mxu0 %v755
    %1107 = vmatpush1.bf16.msra.mxu0 %v754
    %1108 = vmatprep.subr.bf16.mxu0 %v761
    %1109 = vmatpush1.bf16.msra.mxu0 %v760
    %1110 = vmatprep.subr.bf16.mxu0 %v767
    %1111 = vmatpush1.bf16.msra.mxu0 %v766
    %1112 = vmatprep.subr.bf16.mxu0 %v773
    %1113 = vmatpush1.bf16.msra.mxu0 %v772
    %1114 = vmatprep.subr.bf16.mxu0 %v779
    %1115 = vmatpush1.bf16.msra.mxu0 %v778
    %1116 = vmatprep.subr.bf16.mxu0 %v785
    %1117 = vmatpush1.bf16.msra.mxu0 %v784
    %1118 = vmatprep.subr.bf16.mxu0 %v791
    %1119 = vmatpush1.bf16.msra.mxu0 %v790
    %1120 = vmatprep.subr.bf16.mxu0 %v797
    %1121 = vmatpush1.bf16.msra.mxu0 %v796
    %1122 = vmatprep.subr.bf16.mxu0 %v803
    %1123 = vmatpush1.bf16.msra.mxu0 %v802
    %1124 = vmatprep.subr.bf16.mxu0 %v809
    %1125 = vmatpush1.bf16.msra.mxu0 %v808
    %1126 = vmatprep.subr.bf16.mxu0 %v815
    %1127 = vmatpush1.bf16.msra.mxu0 %v814
    %1128 = vmatprep.mubr.bf16.mxu0 %v112
    %1129 = vmatmul.mubr.bf16.gmra.mrb[0].mxu0 %v111
    %v1130 = vpop.f32.mrb[0].mxu0
    %v1131 = vadd.f32 %v271, %v1130
    %v1132 = vpop.f32.mrb[0].mxu0
    %v1133 = vadd.f32 %v275, %v1132
    %v1134 = vpop.f32.mrb[0].mxu0
    %v1135 = vadd.f32 %v271, %v1134
    %v1136 = vpop.f32.mrb[0].mxu0
    %v1137 = vadd.f32 %v275, %v1136
    %1138 = vdwg.mxu0
    %1139 = vmatprep.subr.bf16.mxu0 %v821
    %1140 = vmatpush1.bf16.msra.mxu0 %v820
    %1141 = vmatprep.subr.bf16.mxu0 %v827
    %1142 = vmatpush1.bf16.msra.mxu0 %v826
    %1143 = vmatprep.subr.bf16.mxu0 %v833
    %1144 = vmatpush1.bf16.msra.mxu0 %v832
    %1145 = vmatprep.subr.bf16.mxu0 %v839
    %1146 = vmatpush1.bf16.msra.mxu0 %v838
    %1147 = vmatprep.subr.bf16.mxu0 %v845
    %1148 = vmatpush1.bf16.msra.mxu0 %v844
    %1149 = vmatprep.subr.bf16.mxu0 %v851
    %1150 = vmatpush1.bf16.msra.mxu0 %v850
    %1151 = vmatprep.subr.bf16.mxu0 %v857
    %1152 = vmatpush1.bf16.msra.mxu0 %v856
    %1153 = vmatprep.subr.bf16.mxu0 %v863
    %1154 = vmatpush1.bf16.msra.mxu0 %v862
    %1155 = vmatprep.subr.bf16.mxu0 0
    %1156 = vmatpush1.bf16.msra.mxu0 0
    %1157 = vmatprep.subr.bf16.mxu0 0
    %1158 = vmatpush1.bf16.msra.mxu0 0
    %1159 = vmatprep.subr.bf16.mxu0 0
    %1160 = vmatpush1.bf16.msra.mxu0 0
    %1161 = vmatprep.subr.bf16.mxu0 0
    %1162 = vmatpush1.bf16.msra.mxu0 0
    %1163 = vmatprep.subr.bf16.mxu0 0
    %1164 = vmatpush1.bf16.msra.mxu0 0
    %1165 = vmatprep.subr.bf16.mxu0 0
    %1166 = vmatpush1.bf16.msra.mxu0 0
    %1167 = vmatprep.subr.bf16.mxu0 0
    %1168 = vmatpush1.bf16.msra.mxu0 0
    %1169 = vmatprep.subr.bf16.mxu0 0
    %1170 = vmatpush1.bf16.msra.mxu0 0
    %1171 = vmatprep.mubr.bf16.mxu0 0
    %1172 = vmatmul.mubr.bf16.gmra.mrb[0].mxu0 %v113
    %v1173 = vpop.f32.mrb[0].mxu0
    %v1174 = vadd.f32 %v1131, %v1173
    %v1175 = vpop.f32.mrb[0].mxu0
    %v1176 = vadd.f32 %v1133, %v1175
    %v1177 = vpop.f32.mrb[0].mxu0
    %v1178 = vadd.f32 %v1135, %v1177
    %v1179 = vpop.f32.mrb[0].mxu0
    %v1180 = vadd.f32 %v1137, %v1179
    %1181 = vdwg.mxu0
    %1182 = vmatprep.subr.bf16.mxu0 %v727
    %1183 = vmatpush1.bf16.msra.mxu0 %v726
    %1184 = vmatprep.subr.bf16.mxu0 %v733
    %1185 = vmatpush1.bf16.msra.mxu0 %v732
    %1186 = vmatprep.subr.bf16.mxu0 %v739
    %1187 = vmatpush1.bf16.msra.mxu0 %v738
    %1188 = vmatprep.subr.bf16.mxu0 %v745
    %1189 = vmatpush1.bf16.msra.mxu0 %v744
    %1190 = vmatprep.subr.bf16.mxu0 %v751
    %1191 = vmatpush1.bf16.msra.mxu0 %v750
    %1192 = vmatprep.subr.bf16.mxu0 %v757
    %1193 = vmatpush1.bf16.msra.mxu0 %v756
    %1194 = vmatprep.subr.bf16.mxu0 %v763
    %1195 = vmatpush1.bf16.msra.mxu0 %v762
    %1196 = vmatprep.subr.bf16.mxu0 %v769
    %1197 = vmatpush1.bf16.msra.mxu0 %v768
    %1198 = vmatprep.subr.bf16.mxu0 %v775
    %1199 = vmatpush1.bf16.msra.mxu0 %v774
    %1200 = vmatprep.subr.bf16.mxu0 %v781
    %1201 = vmatpush1.bf16.msra.mxu0 %v780
    %1202 = vmatprep.subr.bf16.mxu0 %v787
    %1203 = vmatpush1.bf16.msra.mxu0 %v786
    %1204 = vmatprep.subr.bf16.mxu0 %v793
    %1205 = vmatpush1.bf16.msra.mxu0 %v792
    %1206 = vmatprep.subr.bf16.mxu0 %v799
    %1207 = vmatpush1.bf16.msra.mxu0 %v798
    %1208 = vmatprep.subr.bf16.mxu0 %v805
    %1209 = vmatpush1.bf16.msra.mxu0 %v804
    %1210 = vmatprep.subr.bf16.mxu0 %v811
    %1211 = vmatpush1.bf16.msra.mxu0 %v810
    %1212 = vmatprep.subr.bf16.mxu0 %v817
    %1213 = vmatpush1.bf16.msra.mxu0 %v816
    %1214 = vmatprep.mubr.bf16.mxu0 %v112
    %1215 = vmatmul.mubr.bf16.gmra.mrb[0].mxu0 %v111
    %v1216 = vpop.f32.mrb[0].mxu0
    %v1217 = vadd.f32 %v279, %v1216
    %v1218 = vpop.f32.mrb[0].mxu0
    %v1219 = vadd.f32 %v283, %v1218
    %v1220 = vpop.f32.mrb[0].mxu0
    %v1221 = vadd.f32 %v279, %v1220
    %v1222 = vpop.f32.mrb[0].mxu0
    %v1223 = vadd.f32 %v283, %v1222
    %1224 = vdwg.mxu0
    %1225 = vmatprep.subr.bf16.mxu0 %v823
    %1226 = vmatpush1.bf16.msra.mxu0 %v822
    %1227 = vmatprep.subr.bf16.mxu0 %v829
    %1228 = vmatpush1.bf16.msra.mxu0 %v828
    %1229 = vmatprep.subr.bf16.mxu0 %v835
    %1230 = vmatpush1.bf16.msra.mxu0 %v834
    %1231 = vmatprep.subr.bf16.mxu0 %v841
    %1232 = vmatpush1.bf16.msra.mxu0 %v840
    %1233 = vmatprep.subr.bf16.mxu0 %v847
    %1234 = vmatpush1.bf16.msra.mxu0 %v846
    %1235 = vmatprep.subr.bf16.mxu0 %v853
    %1236 = vmatpush1.bf16.msra.mxu0 %v852
    %1237 = vmatprep.subr.bf16.mxu0 %v859
    %1238 = vmatpush1.bf16.msra.mxu0 %v858
    %1239 = vmatprep.subr.bf16.mxu0 %v865
    %1240 = vmatpush1.bf16.msra.mxu0 %v864
    %1241 = vmatprep.subr.bf16.mxu0 0
    %1242 = vmatpush1.bf16.msra.mxu0 0
    %1243 = vmatprep.subr.bf16.mxu0 0
    %1244 = vmatpush1.bf16.msra.mxu0 0
    %1245 = vmatprep.subr.bf16.mxu0 0
    %1246 = vmatpush1.bf16.msra.mxu0 0
    %1247 = vmatprep.subr.bf16.mxu0 0
    %1248 = vmatpush1.bf16.msra.mxu0 0
    %1249 = vmatprep.subr.bf16.mxu0 0
    %1250 = vmatpush1.bf16.msra.mxu0 0
    %1251 = vmatprep.subr.bf16.mxu0 0
    %1252 = vmatpush1.bf16.msra.mxu0 0
    %1253 = vmatprep.subr.bf16.mxu0 0
    %1254 = vmatpush1.bf16.msra.mxu0 0
    %1255 = vmatprep.subr.bf16.mxu0 0
    %1256 = vmatpush1.bf16.msra.mxu0 0
    %1257 = vmatprep.mubr.bf16.mxu0 0
    %1258 = vmatmul.mubr.bf16.gmra.mrb[0].mxu0 %v113
    %v1259 = vpop.f32.mrb[0].mxu0
    %v1260 = vadd.f32 %v1217, %v1259
    %v1261 = vpop.f32.mrb[0].mxu0
    %v1262 = vadd.f32 %v1219, %v1261
    %v1263 = vpop.f32.mrb[0].mxu0
    %v1264 = vadd.f32 %v1221, %v1263
    %v1265 = vpop.f32.mrb[0].mxu0
    %v1266 = vadd.f32 %v1223, %v1265
    %1267 = vdwg.mxu0
    %v1268 = vmax.f32 %v1088, 0.0
    %v1269 = vmax.f32 %v1090, 0.0
    %v1270 = vmax.f32 %v1174, 0.0
    %v1271 = vmax.f32 %v1176, 0.0
    %v1272 = vmax.f32 %v1260, 0.0
    %v1273 = vmax.f32 %v1262, 0.0
    %v1274 = vmax.f32 %v1092, 0.0
    %v1275 = vmax.f32 %v1094, 0.0
    %v1276 = vmax.f32 %v1178, 0.0
    %v1277 = vmax.f32 %v1180, 0.0
    %v1278 = vmax.f32 %v1264, 0.0
    %v1279 = vmax.f32 %v1266, 0.0
    %v1280 = vpack.c.bf16 %v1274, %v1268
    %v1281 = vpack.c.bf16 %v1275, %v1269
    %v1282 = vpack.c.bf16 %v1276, %v1270
    %v1283 = vpack.c.bf16 %v1277, %v1271
    %v1284 = vpack.c.bf16 %v1278, %v1272
    %v1285 = vpack.c.bf16 %v1279, %v1273
    %v1286 = vld [vmem:[#allocation8] sm:$0xff]
    %v1287 = vld [vmem:[#allocation8 + $0x8] sm:$0xff]
    %v1288 = vld [vmem:[#allocation8 + $0x10] sm:$0xff]
    %v1289 = vld [vmem:[#allocation8 + $0x18] sm:$0xff]
    %v1290 = vld [vmem:[#allocation8 + $0x20] sm:$0xff]
    %v1291 = vld [vmem:[#allocation8 + $0x28] sm:$0xff]
    %v1292 = vld [vmem:[#allocation8 + $0x30] sm:$0xff]
    %v1293 = vld [vmem:[#allocation8 + $0x38] sm:$0xff]
    %v1294 = vld [vmem:[#allocation8 + $0x40] sm:$0xff]
    %v1295 = vld [vmem:[#allocation8 + $0x48] sm:$0xff]
    %v1296 = vld [vmem:[#allocation8 + $0x50] sm:$0xff]
    %v1297 = vld [vmem:[#allocation8 + $0x58] sm:$0xff]
    %v1298 = vld [vmem:[#allocation8 + $0x60] sm:$0xff]
    %v1299 = vld [vmem:[#allocation8 + $0x68] sm:$0xff]
    %v1300 = vld [vmem:[#allocation8 + $0x70] sm:$0xff]
    %v1301 = vld [vmem:[#allocation8 + $0x78] sm:$0xff]
    %v1302 = vld [vmem:[#allocation8 + $0x80] sm:$0xff]
    %v1303 = vld [vmem:[#allocation8 + $0x88] sm:$0xff]
    %v1304 = vld [vmem:[#allocation8 + $0x90] sm:$0xff]
    %v1305 = vld [vmem:[#allocation8 + $0x98] sm:$0xff]
    %v1306 = vld [vmem:[#allocation8 + $0xa0] sm:$0xff]
    %v1307 = vld [vmem:[#allocation8 + $0xa8] sm:$0xff]
    %v1308 = vld [vmem:[#allocation8 + $0xb0] sm:$0xff]
    %v1309 = vld [vmem:[#allocation8 + $0xb8] sm:$0xff]
    %v1310 = vld [vmem:[#allocation8 + $0xc0] sm:$0xff]
    %v1311 = vld [vmem:[#allocation8 + $0xc8] sm:$0xff]
    %v1312 = vld [vmem:[#allocation8 + $0xd0] sm:$0xff]
    %v1313 = vld [vmem:[#allocation8 + $0xd8] sm:$0xff]
    %v1314 = vld [vmem:[#allocation8 + $0xe0] sm:$0xff]
    %v1315 = vld [vmem:[#allocation8 + $0xe8] sm:$0xff]
    %v1316 = vld [vmem:[#allocation8 + $0xf0] sm:$0xff]
    %v1317 = vld [vmem:[#allocation8 + $0xf8] sm:$0xff]
    %v1318 = vld [vmem:[#allocation8 + $0x100] sm:$0xff]
    %v1319 = vld [vmem:[#allocation8 + $0x108] sm:$0xff]
    %v1320 = vld [vmem:[#allocation8 + $0x110] sm:$0xff]
    %v1321 = vld [vmem:[#allocation8 + $0x118] sm:$0xff]
    %v1322 = vld [vmem:[#allocation8 + $0x120] sm:$0xff]
    %v1323 = vld [vmem:[#allocation8 + $0x128] sm:$0xff]
    %v1324 = vld [vmem:[#allocation8 + $0x130] sm:$0xff]
    %v1325 = vld [vmem:[#allocation8 + $0x138] sm:$0xff]
    %v1326 = vld [vmem:[#allocation8 + $0x140] sm:$0xff]
    %v1327 = vld [vmem:[#allocation8 + $0x148] sm:$0xff]
    %v1328 = vld [vmem:[#allocation8 + $0x150] sm:$0xff]
    %v1329 = vld [vmem:[#allocation8 + $0x158] sm:$0xff]
    %v1330 = vld [vmem:[#allocation8 + $0x160] sm:$0xff]
    %v1331 = vld [vmem:[#allocation8 + $0x168] sm:$0xff]
    %v1332 = vld [vmem:[#allocation8 + $0x170] sm:$0xff]
    %v1333 = vld [vmem:[#allocation8 + $0x178] sm:$0xff]
    %v1334 = vld [vmem:[#allocation8 + $0x180] sm:$0xff]
    %v1335 = vld [vmem:[#allocation8 + $0x188] sm:$0xff]
    %v1336 = vld [vmem:[#allocation8 + $0x190] sm:$0xff]
    %v1337 = vld [vmem:[#allocation8 + $0x198] sm:$0xff]
    %v1338 = vld [vmem:[#allocation8 + $0x1a0] sm:$0xff]
    %v1339 = vld [vmem:[#allocation8 + $0x1a8] sm:$0xff]
    %v1340 = vld [vmem:[#allocation8 + $0x1b0] sm:$0xff]
    %v1341 = vld [vmem:[#allocation8 + $0x1b8] sm:$0xff]
    %v1342 = vld [vmem:[#allocation8 + $0x1c0] sm:$0xff]
    %v1343 = vld [vmem:[#allocation8 + $0x1c8] sm:$0xff]
    %v1344 = vld [vmem:[#allocation8 + $0x1d0] sm:$0xff]
    %v1345 = vld [vmem:[#allocation8 + $0x1d8] sm:$0xff]
    %v1346 = vld [vmem:[#allocation8 + $0x1e0] sm:$0xff]
    %v1347 = vld [vmem:[#allocation8 + $0x1e8] sm:$0xff]
    %v1348 = vld [vmem:[#allocation8 + $0x1f0] sm:$0xff]
    %v1349 = vld [vmem:[#allocation8 + $0x1f8] sm:$0xff]
    %v1350 = vld [vmem:[#allocation8 + $0x200] sm:$0xff]
    %v1351 = vld [vmem:[#allocation8 + $0x208] sm:$0xff]
    %v1352 = vld [vmem:[#allocation8 + $0x210] sm:$0xff]
    %v1353 = vld [vmem:[#allocation8 + $0x218] sm:$0xff]
    %v1354 = vld [vmem:[#allocation8 + $0x220] sm:$0xff]
    %v1355 = vld [vmem:[#allocation8 + $0x228] sm:$0xff]
    %v1356 = vld [vmem:[#allocation8 + $0x230] sm:$0xff]
    %v1357 = vld [vmem:[#allocation8 + $0x238] sm:$0xff]
    %v1358 = vld [vmem:[#allocation8 + $0x240] sm:$0xff]
    %v1359 = vld [vmem:[#allocation8 + $0x248] sm:$0xff]
    %v1360 = vld [vmem:[#allocation8 + $0x250] sm:$0xff]
    %v1361 = vld [vmem:[#allocation8 + $0x258] sm:$0xff]
    %v1362 = vld [vmem:[#allocation8 + $0x260] sm:$0xff]
    %v1363 = vld [vmem:[#allocation8 + $0x268] sm:$0xff]
    %v1364 = vld [vmem:[#allocation8 + $0x270] sm:$0xff]
    %v1365 = vld [vmem:[#allocation8 + $0x278] sm:$0xff]
    %v1366 = vld [vmem:[#allocation8 + $0x280] sm:$0xff]
    %v1367 = vld [vmem:[#allocation8 + $0x288] sm:$0xff]
    %v1368 = vld [vmem:[#allocation8 + $0x290] sm:$0xff]
    %v1369 = vld [vmem:[#allocation8 + $0x298] sm:$0xff]
    %v1370 = vld [vmem:[#allocation8 + $0x2a0] sm:$0xff]
    %v1371 = vld [vmem:[#allocation8 + $0x2a8] sm:$0xff]
    %v1372 = vld [vmem:[#allocation8 + $0x2b0] sm:$0xff]
    %v1373 = vld [vmem:[#allocation8 + $0x2b8] sm:$0xff]
    %v1374 = vld [vmem:[#allocation8 + $0x2c0] sm:$0xff]
    %v1375 = vld [vmem:[#allocation8 + $0x2c8] sm:$0xff]
    %v1376 = vld [vmem:[#allocation8 + $0x2d0] sm:$0xff]
    %v1377 = vld [vmem:[#allocation8 + $0x2d8] sm:$0xff]
    %v1378 = vld [vmem:[#allocation8 + $0x2e0] sm:$0xff]
    %v1379 = vld [vmem:[#allocation8 + $0x2e8] sm:$0xff]
    %v1380 = vld [vmem:[#allocation8 + $0x2f0] sm:$0xff]
    %v1381 = vld [vmem:[#allocation8 + $0x2f8] sm:$0xff]
    %v1382 = vld [vmem:[#allocation8 + $0x300] sm:$0xff]
    %v1383 = vld [vmem:[#allocation8 + $0x308] sm:$0xff]
    %v1384 = vld [vmem:[#allocation8 + $0x310] sm:$0xff]
    %v1385 = vld [vmem:[#allocation8 + $0x318] sm:$0xff]
    %v1386 = vld [vmem:[#allocation8 + $0x320] sm:$0xff]
    %v1387 = vld [vmem:[#allocation8 + $0x328] sm:$0xff]
    %v1388 = vld [vmem:[#allocation8 + $0x330] sm:$0xff]
    %v1389 = vld [vmem:[#allocation8 + $0x338] sm:$0xff]
    %v1390 = vld [vmem:[#allocation8 + $0x340] sm:$0xff]
    %v1391 = vld [vmem:[#allocation8 + $0x348] sm:$0xff]
    %v1392 = vld [vmem:[#allocation8 + $0x350] sm:$0xff]
    %v1393 = vld [vmem:[#allocation8 + $0x358] sm:$0xff]
    %v1394 = vld [vmem:[#allocation8 + $0x360] sm:$0xff]
    %v1395 = vld [vmem:[#allocation8 + $0x368] sm:$0xff]
    %v1396 = vld [vmem:[#allocation8 + $0x370] sm:$0xff]
    %v1397 = vld [vmem:[#allocation8 + $0x378] sm:$0xff]
    %v1398 = vld [vmem:[#allocation8 + $0x380] sm:$0xff]
    %v1399 = vld [vmem:[#allocation8 + $0x388] sm:$0xff]
    %v1400 = vld [vmem:[#allocation8 + $0x390] sm:$0xff]
    %v1401 = vld [vmem:[#allocation8 + $0x398] sm:$0xff]
    %v1402 = vld [vmem:[#allocation8 + $0x3a0] sm:$0xff]
    %v1403 = vld [vmem:[#allocation8 + $0x3a8] sm:$0xff]
    %v1404 = vld [vmem:[#allocation8 + $0x3b0] sm:$0xff]
    %v1405 = vld [vmem:[#allocation8 + $0x3b8] sm:$0xff]
    %v1406 = vld [vmem:[#allocation8 + $0x3c0] sm:$0xff]
    %v1407 = vld [vmem:[#allocation8 + $0x3c8] sm:$0xff]
    %v1408 = vld [vmem:[#allocation8 + $0x3d0] sm:$0xff]
    %v1409 = vld [vmem:[#allocation8 + $0x3d8] sm:$0xff]
    %v1410 = vld [vmem:[#allocation8 + $0x3e0] sm:$0xff]
    %v1411 = vld [vmem:[#allocation8 + $0x3e8] sm:$0xff]
    %v1412 = vld [vmem:[#allocation8 + $0x3f0] sm:$0xff]
    %v1413 = vld [vmem:[#allocation8 + $0x3f8] sm:$0xff]
    %v1414 = vld [vmem:[#allocation8 + $0x400] sm:$0xff]
    %v1415 = vld [vmem:[#allocation8 + $0x408] sm:$0xff]
    %v1416 = vld [vmem:[#allocation8 + $0x410] sm:$0xff]
    %v1417 = vld [vmem:[#allocation8 + $0x418] sm:$0xff]
    %v1418 = vld [vmem:[#allocation8 + $0x420] sm:$0xff]
    %v1419 = vld [vmem:[#allocation8 + $0x428] sm:$0xff]
    %v1420 = vld [vmem:[#allocation8 + $0x430] sm:$0xff]
    %v1421 = vld [vmem:[#allocation8 + $0x438] sm:$0xff]
    %v1422 = vld [vmem:[#allocation8 + $0x440] sm:$0xff]
    %v1423 = vld [vmem:[#allocation8 + $0x448] sm:$0xff]
    %v1424 = vld [vmem:[#allocation8 + $0x450] sm:$0xff]
    %v1425 = vld [vmem:[#allocation8 + $0x458] sm:$0xff]
    %v1426 = vld [vmem:[#allocation8 + $0x460] sm:$0xff]
    %v1427 = vld [vmem:[#allocation8 + $0x468] sm:$0xff]
    %v1428 = vld [vmem:[#allocation8 + $0x470] sm:$0xff]
    %v1429 = vld [vmem:[#allocation8 + $0x478] sm:$0xff]
    %v1430 = vld [vmem:[#allocation8 + $0x480] sm:$0xff]
    %v1431 = vld [vmem:[#allocation8 + $0x488] sm:$0xff]
    %v1432 = vld [vmem:[#allocation8 + $0x490] sm:$0xff]
    %v1433 = vld [vmem:[#allocation8 + $0x498] sm:$0xff]
    %v1434 = vld [vmem:[#allocation8 + $0x4a0] sm:$0xff]
    %v1435 = vld [vmem:[#allocation8 + $0x4a8] sm:$0xff]
    %v1436 = vld [vmem:[#allocation8 + $0x4b0] sm:$0xff]
    %v1437 = vld [vmem:[#allocation8 + $0x4b8] sm:$0xff]
    %v1438 = vld [vmem:[#allocation8 + $0x4c0] sm:$0xff]
    %v1439 = vld [vmem:[#allocation8 + $0x4c8] sm:$0xff]
    %v1440 = vld [vmem:[#allocation8 + $0x4d0] sm:$0xff]
    %v1441 = vld [vmem:[#allocation8 + $0x4d8] sm:$0xff]
    %v1442 = vld [vmem:[#allocation8 + $0x4e0] sm:$0xff]
    %v1443 = vld [vmem:[#allocation8 + $0x4e8] sm:$0xff]
    %v1444 = vld [vmem:[#allocation8 + $0x4f0] sm:$0xff]
    %v1445 = vld [vmem:[#allocation8 + $0x4f8] sm:$0xff]
    %v1446 = vld [vmem:[#allocation8 + $0x500] sm:$0xff]
    %v1447 = vld [vmem:[#allocation8 + $0x508] sm:$0xff]
    %v1448 = vld [vmem:[#allocation8 + $0x510] sm:$0xff]
    %v1449 = vld [vmem:[#allocation8 + $0x518] sm:$0xff]
    %v1450 = vld [vmem:[#allocation8 + $0x520] sm:$0xff]
    %v1451 = vld [vmem:[#allocation8 + $0x528] sm:$0xff]
    %v1452 = vld [vmem:[#allocation8 + $0x530] sm:$0xff]
    %v1453 = vld [vmem:[#allocation8 + $0x538] sm:$0xff]
    %v1454 = vld [vmem:[#allocation8 + $0x540] sm:$0xff]
    %v1455 = vld [vmem:[#allocation8 + $0x548] sm:$0xff]
    %v1456 = vld [vmem:[#allocation8 + $0x550] sm:$0xff]
    %v1457 = vld [vmem:[#allocation8 + $0x558] sm:$0xff]
    %v1458 = vld [vmem:[#allocation8 + $0x560] sm:$0xff]
    %v1459 = vld [vmem:[#allocation8 + $0x568] sm:$0xff]
    %v1460 = vld [vmem:[#allocation8 + $0x570] sm:$0xff]
    %v1461 = vld [vmem:[#allocation8 + $0x578] sm:$0xff]
    %v1462 = vld [vmem:[#allocation8 + $0x580] sm:$0xff]
    %v1463 = vld [vmem:[#allocation8 + $0x588] sm:$0xff]
    %v1464 = vld [vmem:[#allocation8 + $0x590] sm:$0xff]
    %v1465 = vld [vmem:[#allocation8 + $0x598] sm:$0xff]
    %v1466 = vld [vmem:[#allocation8 + $0x5a0] sm:$0xff]
    %v1467 = vld [vmem:[#allocation8 + $0x5a8] sm:$0xff]
    %v1468 = vld [vmem:[#allocation8 + $0x5b0] sm:$0xff]
    %v1469 = vld [vmem:[#allocation8 + $0x5b8] sm:$0xff]
    %v1470 = vld [vmem:[#allocation8 + $0x5c0] sm:$0xff]
    %v1471 = vld [vmem:[#allocation8 + $0x5c8] sm:$0xff]
    %v1472 = vld [vmem:[#allocation8 + $0x5d0] sm:$0xff]
    %v1473 = vld [vmem:[#allocation8 + $0x5d8] sm:$0xff]
    %v1474 = vld [vmem:[#allocation8 + $0x5e0] sm:$0xff]
    %v1475 = vld [vmem:[#allocation8 + $0x5e8] sm:$0xff]
    %v1476 = vld [vmem:[#allocation8 + $0x5f0] sm:$0xff]
    %v1477 = vld [vmem:[#allocation8 + $0x5f8] sm:$0xff]
    %v1478 = vld [vmem:[#allocation8 + $0x600] sm:$0xff]
    %v1479 = vld [vmem:[#allocation8 + $0x608] sm:$0xff]
    %v1480 = vld [vmem:[#allocation8 + $0x610] sm:$0xff]
    %v1481 = vld [vmem:[#allocation8 + $0x618] sm:$0xff]
    %v1482 = vld [vmem:[#allocation8 + $0x620] sm:$0xff]
    %v1483 = vld [vmem:[#allocation8 + $0x628] sm:$0xff]
    %v1484 = vld [vmem:[#allocation8 + $0x630] sm:$0xff]
    %v1485 = vld [vmem:[#allocation8 + $0x638] sm:$0xff]
    %v1486 = vld [vmem:[#allocation8 + $0x640] sm:$0xff]
    %v1487 = vld [vmem:[#allocation8 + $0x648] sm:$0xff]
    %v1488 = vld [vmem:[#allocation8 + $0x650] sm:$0xff]
    %v1489 = vld [vmem:[#allocation8 + $0x658] sm:$0xff]
    %v1490 = vld [vmem:[#allocation8 + $0x660] sm:$0xff]
    %v1491 = vld [vmem:[#allocation8 + $0x668] sm:$0xff]
    %v1492 = vld [vmem:[#allocation8 + $0x670] sm:$0xff]
    %v1493 = vld [vmem:[#allocation8 + $0x678] sm:$0xff]
    %v1494 = vld [vmem:[#allocation8 + $0x680] sm:$0xff]
    %v1495 = vld [vmem:[#allocation8 + $0x688] sm:$0xff]
    %v1496 = vld [vmem:[#allocation8 + $0x690] sm:$0xff]
    %v1497 = vld [vmem:[#allocation8 + $0x698] sm:$0xff]
    %v1498 = vld [vmem:[#allocation8 + $0x6a0] sm:$0xff]
    %v1499 = vld [vmem:[#allocation8 + $0x6a8] sm:$0xff]
    %v1500 = vld [vmem:[#allocation8 + $0x6b0] sm:$0xff]
    %v1501 = vld [vmem:[#allocation8 + $0x6b8] sm:$0xff]
    %v1502 = vld [vmem:[#allocation8 + $0x6c0] sm:$0xff]
    %v1503 = vld [vmem:[#allocation8 + $0x6c8] sm:$0xff]
    %v1504 = vld [vmem:[#allocation8 + $0x6d0] sm:$0xff]
    %v1505 = vld [vmem:[#allocation8 + $0x6d8] sm:$0xff]
    %v1506 = vld [vmem:[#allocation8 + $0x6e0] sm:$0xff]
    %v1507 = vld [vmem:[#allocation8 + $0x6e8] sm:$0xff]
    %v1508 = vld [vmem:[#allocation8 + $0x6f0] sm:$0xff]
    %v1509 = vld [vmem:[#allocation8 + $0x6f8] sm:$0xff]
    %v1510 = vld [vmem:[#allocation8 + $0x700] sm:$0xff]
    %v1511 = vld [vmem:[#allocation8 + $0x708] sm:$0xff]
    %v1512 = vld [vmem:[#allocation8 + $0x710] sm:$0xff]
    %v1513 = vld [vmem:[#allocation8 + $0x718] sm:$0xff]
    %v1514 = vld [vmem:[#allocation8 + $0x720] sm:$0xff]
    %v1515 = vld [vmem:[#allocation8 + $0x728] sm:$0xff]
    %v1516 = vld [vmem:[#allocation8 + $0x730] sm:$0xff]
    %v1517 = vld [vmem:[#allocation8 + $0x738] sm:$0xff]
    %v1518 = vld [vmem:[#allocation8 + $0x740] sm:$0xff]
    %v1519 = vld [vmem:[#allocation8 + $0x748] sm:$0xff]
    %v1520 = vld [vmem:[#allocation8 + $0x750] sm:$0xff]
    %v1521 = vld [vmem:[#allocation8 + $0x758] sm:$0xff]
    %v1522 = vld [vmem:[#allocation8 + $0x760] sm:$0xff]
    %v1523 = vld [vmem:[#allocation8 + $0x768] sm:$0xff]
    %v1524 = vld [vmem:[#allocation8 + $0x770] sm:$0xff]
    %v1525 = vld [vmem:[#allocation8 + $0x778] sm:$0xff]
    %v1526 = vld [vmem:[#allocation8 + $0x780] sm:$0xff]
    %v1527 = vld [vmem:[#allocation8 + $0x788] sm:$0xff]
    %v1528 = vld [vmem:[#allocation8 + $0x790] sm:$0xff]
    %v1529 = vld [vmem:[#allocation8 + $0x798] sm:$0xff]
    %v1530 = vld [vmem:[#allocation8 + $0x7a0] sm:$0xff]
    %v1531 = vld [vmem:[#allocation8 + $0x7a8] sm:$0xff]
    %v1532 = vld [vmem:[#allocation8 + $0x7b0] sm:$0xff]
    %v1533 = vld [vmem:[#allocation8 + $0x7b8] sm:$0xff]
    %v1534 = vld [vmem:[#allocation8 + $0x7c0] sm:$0xff]
    %v1535 = vld [vmem:[#allocation8 + $0x7c8] sm:$0xff]
    %v1536 = vld [vmem:[#allocation8 + $0x7d0] sm:$0xff]
    %v1537 = vld [vmem:[#allocation8 + $0x7d8] sm:$0xff]
    %v1538 = vld [vmem:[#allocation8 + $0x7e0] sm:$0xff]
    %v1539 = vld [vmem:[#allocation8 + $0x7e8] sm:$0xff]
    %v1540 = vld [vmem:[#allocation8 + $0x7f0] sm:$0xff]
    %v1541 = vld [vmem:[#allocation8 + $0x7f8] sm:$0xff]
    %v1542 = vld [vmem:[#allocation8 + $0x800] sm:$0xff]
    %v1543 = vld [vmem:[#allocation8 + $0x808] sm:$0xff]
    %v1544 = vld [vmem:[#allocation8 + $0x810] sm:$0xff]
    %v1545 = vld [vmem:[#allocation8 + $0x818] sm:$0xff]
    %v1546 = vld [vmem:[#allocation8 + $0x820] sm:$0xff]
    %v1547 = vld [vmem:[#allocation8 + $0x828] sm:$0xff]
    %v1548 = vld [vmem:[#allocation8 + $0x830] sm:$0xff]
    %v1549 = vld [vmem:[#allocation8 + $0x838] sm:$0xff]
    %v1550 = vld [vmem:[#allocation8 + $0x840] sm:$0xff]
    %v1551 = vld [vmem:[#allocation8 + $0x848] sm:$0xff]
    %v1552 = vld [vmem:[#allocation8 + $0x850] sm:$0xff]
    %v1553 = vld [vmem:[#allocation8 + $0x858] sm:$0xff]
    %v1554 = vld [vmem:[#allocation8 + $0x860] sm:$0xff]
    %v1555 = vld [vmem:[#allocation8 + $0x868] sm:$0xff]
    %v1556 = vld [vmem:[#allocation8 + $0x870] sm:$0xff]
    %v1557 = vld [vmem:[#allocation8 + $0x878] sm:$0xff]
    %v1558 = vld [vmem:[#allocation8 + $0x880] sm:$0xff]
    %v1559 = vld [vmem:[#allocation8 + $0x888] sm:$0xff]
    %v1560 = vld [vmem:[#allocation8 + $0x890] sm:$0xff]
    %v1561 = vld [vmem:[#allocation8 + $0x898] sm:$0xff]
    %v1562 = vld [vmem:[#allocation8 + $0x8a0] sm:$0xff]
    %v1563 = vld [vmem:[#allocation8 + $0x8a8] sm:$0xff]
    %v1564 = vld [vmem:[#allocation8 + $0x8b0] sm:$0xff]
    %v1565 = vld [vmem:[#allocation8 + $0x8b8] sm:$0xff]
    %v1566 = vld [vmem:[#allocation8 + $0x8c0] sm:$0xff]
    %v1567 = vld [vmem:[#allocation8 + $0x8c8] sm:$0xff]
    %v1568 = vld [vmem:[#allocation8 + $0x8d0] sm:$0xff]
    %v1569 = vld [vmem:[#allocation8 + $0x8d8] sm:$0xff]
    %v1570 = vld [vmem:[#allocation8 + $0x8e0] sm:$0xff]
    %v1571 = vld [vmem:[#allocation8 + $0x8e8] sm:$0xff]
    %v1572 = vld [vmem:[#allocation8 + $0x8f0] sm:$0xff]
    %v1573 = vld [vmem:[#allocation8 + $0x8f8] sm:$0xff]
    %v1574 = vld [vmem:[#allocation10] sm:$0x3f]
    %v1576 = vlaneseq
    %v1577 = vshrl.u32 %v1576, 7
    %v1578 = vsub.s32 0, %v1577
    %v1579 = vrot.slane %v1574, %v1578
    %v1580 = vlaneseq
    %v1581 = vshrl.u32 %v1580, 7
    %v1582 = vsub.s32 1, %v1581
    %v1583 = vrot.slane %v1574, %v1582
    %v1584 = vlaneseq
    %v1585 = vshrl.u32 %v1584, 7
    %v1586 = vsub.s32 2, %v1585
    %v1587 = vrot.slane %v1574, %v1586
    %v1588 = vlaneseq
    %v1589 = vshrl.u32 %v1588, 7
    %v1590 = vsub.s32 3, %v1589
    %v1591 = vrot.slane %v1574, %v1590
    %v1592 = vlaneseq
    %v1593 = vshrl.u32 %v1592, 7
    %v1594 = vsub.s32 4, %v1593
    %v1595 = vrot.slane %v1574, %v1594
    %v1596 = vlaneseq
    %v1597 = vshrl.u32 %v1596, 7
    %v1598 = vsub.s32 5, %v1597
    %v1599 = vrot.slane %v1574, %v1598
    %v1894 = vunpack.c.l.b16 %v1286
    %v1895 = vunpack.c.h.b16 %v1286
    %v1896 = vunpack.c.l.b16 %v1287
    %v1897 = vunpack.c.h.b16 %v1287
    %v1898 = vunpack.c.l.b16 %v1288
    %v1899 = vunpack.c.h.b16 %v1288
    %v1900 = vunpack.c.l.b16 %v1289
    %v1901 = vunpack.c.h.b16 %v1289
    %v1902 = vunpack.c.l.b16 %v1290
    %v1903 = vunpack.c.h.b16 %v1290
    %v1904 = vunpack.c.l.b16 %v1291
    %v1905 = vunpack.c.h.b16 %v1291
    %v1906 = vunpack.c.l.b16 %v1292
    %v1907 = vunpack.c.h.b16 %v1292
    %v1908 = vunpack.c.l.b16 %v1293
    %v1909 = vunpack.c.h.b16 %v1293
    %v1910 = vunpack.c.l.b16 %v1294
    %v1911 = vunpack.c.h.b16 %v1294
    %v1912 = vunpack.c.l.b16 %v1295
    %v1913 = vunpack.c.h.b16 %v1295
    %v1914 = vunpack.c.l.b16 %v1296
    %v1915 = vunpack.c.h.b16 %v1296
    %v1916 = vunpack.c.l.b16 %v1297
    %v1917 = vunpack.c.h.b16 %v1297
    %v1918 = vunpack.c.l.b16 %v1298
    %v1919 = vunpack.c.h.b16 %v1298
    %v1920 = vunpack.c.l.b16 %v1299
    %v1921 = vunpack.c.h.b16 %v1299
    %v1922 = vunpack.c.l.b16 %v1300
    %v1923 = vunpack.c.h.b16 %v1300
    %v1924 = vunpack.c.l.b16 %v1301
    %v1925 = vunpack.c.h.b16 %v1301
    %v1926 = vunpack.c.l.b16 %v1302
    %v1927 = vunpack.c.h.b16 %v1302
    %v1928 = vunpack.c.l.b16 %v1303
    %v1929 = vunpack.c.h.b16 %v1303
    %v1930 = vunpack.c.l.b16 %v1304
    %v1931 = vunpack.c.h.b16 %v1304
    %v1932 = vunpack.c.l.b16 %v1305
    %v1933 = vunpack.c.h.b16 %v1305
    %v1934 = vunpack.c.l.b16 %v1306
    %v1935 = vunpack.c.h.b16 %v1306
    %v1936 = vunpack.c.l.b16 %v1307
    %v1937 = vunpack.c.h.b16 %v1307
    %v1938 = vunpack.c.l.b16 %v1308
    %v1939 = vunpack.c.h.b16 %v1308
    %v1940 = vunpack.c.l.b16 %v1309
    %v1941 = vunpack.c.h.b16 %v1309
    %v1942 = vunpack.c.l.b16 %v1310
    %v1943 = vunpack.c.h.b16 %v1310
    %v1944 = vunpack.c.l.b16 %v1311
    %v1945 = vunpack.c.h.b16 %v1311
    %v1946 = vunpack.c.l.b16 %v1312
    %v1947 = vunpack.c.h.b16 %v1312
    %v1948 = vunpack.c.l.b16 %v1313
    %v1949 = vunpack.c.h.b16 %v1313
    %v1950 = vunpack.c.l.b16 %v1314
    %v1951 = vunpack.c.h.b16 %v1314
    %v1952 = vunpack.c.l.b16 %v1315
    %v1953 = vunpack.c.h.b16 %v1315
    %v1954 = vunpack.c.l.b16 %v1316
    %v1955 = vunpack.c.h.b16 %v1316
    %v1956 = vunpack.c.l.b16 %v1317
    %v1957 = vunpack.c.h.b16 %v1317
    %v1958 = vunpack.c.l.b16 %v1318
    %v1959 = vunpack.c.h.b16 %v1318
    %v1960 = vunpack.c.l.b16 %v1319
    %v1961 = vunpack.c.h.b16 %v1319
    %v1962 = vunpack.c.l.b16 %v1320
    %v1963 = vunpack.c.h.b16 %v1320
    %v1964 = vunpack.c.l.b16 %v1321
    %v1965 = vunpack.c.h.b16 %v1321
    %v1966 = vunpack.c.l.b16 %v1322
    %v1967 = vunpack.c.h.b16 %v1322
    %v1968 = vunpack.c.l.b16 %v1323
    %v1969 = vunpack.c.h.b16 %v1323
    %v1970 = vunpack.c.l.b16 %v1324
    %v1971 = vunpack.c.h.b16 %v1324
    %v1972 = vunpack.c.l.b16 %v1325
    %v1973 = vunpack.c.h.b16 %v1325
    %v1974 = vunpack.c.l.b16 %v1326
    %v1975 = vunpack.c.h.b16 %v1326
    %v1976 = vunpack.c.l.b16 %v1327
    %v1977 = vunpack.c.h.b16 %v1327
    %v1978 = vunpack.c.l.b16 %v1328
    %v1979 = vunpack.c.h.b16 %v1328
    %v1980 = vunpack.c.l.b16 %v1329
    %v1981 = vunpack.c.h.b16 %v1329
    %v1982 = vunpack.c.l.b16 %v1330
    %v1983 = vunpack.c.h.b16 %v1330
    %v1984 = vunpack.c.l.b16 %v1331
    %v1985 = vunpack.c.h.b16 %v1331
    %v1986 = vunpack.c.l.b16 %v1332
    %v1987 = vunpack.c.h.b16 %v1332
    %v1988 = vunpack.c.l.b16 %v1333
    %v1989 = vunpack.c.h.b16 %v1333
    %v1990 = vunpack.c.l.b16 %v1334
    %v1991 = vunpack.c.h.b16 %v1334
    %v1992 = vunpack.c.l.b16 %v1335
    %v1993 = vunpack.c.h.b16 %v1335
    %v1994 = vunpack.c.l.b16 %v1336
    %v1995 = vunpack.c.h.b16 %v1336
    %v1996 = vunpack.c.l.b16 %v1337
    %v1997 = vunpack.c.h.b16 %v1337
    %v1998 = vunpack.c.l.b16 %v1338
    %v1999 = vunpack.c.h.b16 %v1338
    %v2000 = vunpack.c.l.b16 %v1339
    %v2001 = vunpack.c.h.b16 %v1339
    %v2002 = vunpack.c.l.b16 %v1340
    %v2003 = vunpack.c.h.b16 %v1340
    %v2004 = vunpack.c.l.b16 %v1341
    %v2005 = vunpack.c.h.b16 %v1341
    %v2006 = vunpack.c.l.b16 %v1342
    %v2007 = vunpack.c.h.b16 %v1342
    %v2008 = vunpack.c.l.b16 %v1343
    %v2009 = vunpack.c.h.b16 %v1343
    %v2010 = vunpack.c.l.b16 %v1344
    %v2011 = vunpack.c.h.b16 %v1344
    %v2012 = vunpack.c.l.b16 %v1345
    %v2013 = vunpack.c.h.b16 %v1345
    %v2014 = vunpack.c.l.b16 %v1346
    %v2015 = vunpack.c.h.b16 %v1346
    %v2016 = vunpack.c.l.b16 %v1347
    %v2017 = vunpack.c.h.b16 %v1347
    %v2018 = vunpack.c.l.b16 %v1348
    %v2019 = vunpack.c.h.b16 %v1348
    %v2020 = vunpack.c.l.b16 %v1349
    %v2021 = vunpack.c.h.b16 %v1349
    %v2022 = vunpack.c.l.b16 %v1350
    %v2023 = vunpack.c.h.b16 %v1350
    %v2024 = vunpack.c.l.b16 %v1351
    %v2025 = vunpack.c.h.b16 %v1351
    %v2026 = vunpack.c.l.b16 %v1352
    %v2027 = vunpack.c.h.b16 %v1352
    %v2028 = vunpack.c.l.b16 %v1353
    %v2029 = vunpack.c.h.b16 %v1353
    %v2030 = vunpack.c.l.b16 %v1354
    %v2031 = vunpack.c.h.b16 %v1354
    %v2032 = vunpack.c.l.b16 %v1355
    %v2033 = vunpack.c.h.b16 %v1355
    %v2034 = vunpack.c.l.b16 %v1356
    %v2035 = vunpack.c.h.b16 %v1356
    %v2036 = vunpack.c.l.b16 %v1357
    %v2037 = vunpack.c.h.b16 %v1357
    %v2038 = vunpack.c.l.b16 %v1358
    %v2039 = vunpack.c.h.b16 %v1358
    %v2040 = vunpack.c.l.b16 %v1359
    %v2041 = vunpack.c.h.b16 %v1359
    %v2042 = vunpack.c.l.b16 %v1360
    %v2043 = vunpack.c.h.b16 %v1360
    %v2044 = vunpack.c.l.b16 %v1361
    %v2045 = vunpack.c.h.b16 %v1361
    %v2046 = vunpack.c.l.b16 %v1362
    %v2047 = vunpack.c.h.b16 %v1362
    %v2048 = vunpack.c.l.b16 %v1363
    %v2049 = vunpack.c.h.b16 %v1363
    %v2050 = vunpack.c.l.b16 %v1364
    %v2051 = vunpack.c.h.b16 %v1364
    %v2052 = vunpack.c.l.b16 %v1365
    %v2053 = vunpack.c.h.b16 %v1365
    %v2054 = vunpack.c.l.b16 %v1366
    %v2055 = vunpack.c.h.b16 %v1366
    %v2056 = vunpack.c.l.b16 %v1367
    %v2057 = vunpack.c.h.b16 %v1367
    %v2058 = vunpack.c.l.b16 %v1368
    %v2059 = vunpack.c.h.b16 %v1368
    %v2060 = vunpack.c.l.b16 %v1369
    %v2061 = vunpack.c.h.b16 %v1369
    %v2062 = vunpack.c.l.b16 %v1370
    %v2063 = vunpack.c.h.b16 %v1370
    %v2064 = vunpack.c.l.b16 %v1371
    %v2065 = vunpack.c.h.b16 %v1371
    %v2066 = vunpack.c.l.b16 %v1372
    %v2067 = vunpack.c.h.b16 %v1372
    %v2068 = vunpack.c.l.b16 %v1373
    %v2069 = vunpack.c.h.b16 %v1373
    %v2070 = vunpack.c.l.b16 %v1374
    %v2071 = vunpack.c.h.b16 %v1374
    %v2072 = vunpack.c.l.b16 %v1375
    %v2073 = vunpack.c.h.b16 %v1375
    %v2074 = vunpack.c.l.b16 %v1376
    %v2075 = vunpack.c.h.b16 %v1376
    %v2076 = vunpack.c.l.b16 %v1377
    %v2077 = vunpack.c.h.b16 %v1377
    %v2078 = vunpack.c.l.b16 %v1378
    %v2079 = vunpack.c.h.b16 %v1378
    %v2080 = vunpack.c.l.b16 %v1379
    %v2081 = vunpack.c.h.b16 %v1379
    %v2082 = vunpack.c.l.b16 %v1380
    %v2083 = vunpack.c.h.b16 %v1380
    %v2084 = vunpack.c.l.b16 %v1381
    %v2085 = vunpack.c.h.b16 %v1381
    %v2086 = vunpack.c.l.b16 %v1382
    %v2087 = vunpack.c.h.b16 %v1382
    %v2088 = vunpack.c.l.b16 %v1383
    %v2089 = vunpack.c.h.b16 %v1383
    %v2090 = vunpack.c.l.b16 %v1384
    %v2091 = vunpack.c.h.b16 %v1384
    %v2092 = vunpack.c.l.b16 %v1385
    %v2093 = vunpack.c.h.b16 %v1385
    %v2094 = vunpack.c.l.b16 %v1386
    %v2095 = vunpack.c.h.b16 %v1386
    %v2096 = vunpack.c.l.b16 %v1387
    %v2097 = vunpack.c.h.b16 %v1387
    %v2098 = vunpack.c.l.b16 %v1388
    %v2099 = vunpack.c.h.b16 %v1388
    %v2100 = vunpack.c.l.b16 %v1389
    %v2101 = vunpack.c.h.b16 %v1389
    %v2102 = vunpack.c.l.b16 %v1390
    %v2103 = vunpack.c.h.b16 %v1390
    %v2104 = vunpack.c.l.b16 %v1391
    %v2105 = vunpack.c.h.b16 %v1391
    %v2106 = vunpack.c.l.b16 %v1392
    %v2107 = vunpack.c.h.b16 %v1392
    %v2108 = vunpack.c.l.b16 %v1393
    %v2109 = vunpack.c.h.b16 %v1393
    %v2110 = vunpack.c.l.b16 %v1394
    %v2111 = vunpack.c.h.b16 %v1394
    %v2112 = vunpack.c.l.b16 %v1395
    %v2113 = vunpack.c.h.b16 %v1395
    %v2114 = vunpack.c.l.b16 %v1396
    %v2115 = vunpack.c.h.b16 %v1396
    %v2116 = vunpack.c.l.b16 %v1397
    %v2117 = vunpack.c.h.b16 %v1397
    %v2118 = vunpack.c.l.b16 %v1398
    %v2119 = vunpack.c.h.b16 %v1398
    %v2120 = vunpack.c.l.b16 %v1399
    %v2121 = vunpack.c.h.b16 %v1399
    %v2122 = vunpack.c.l.b16 %v1400
    %v2123 = vunpack.c.h.b16 %v1400
    %v2124 = vunpack.c.l.b16 %v1401
    %v2125 = vunpack.c.h.b16 %v1401
    %v2126 = vunpack.c.l.b16 %v1402
    %v2127 = vunpack.c.h.b16 %v1402
    %v2128 = vunpack.c.l.b16 %v1403
    %v2129 = vunpack.c.h.b16 %v1403
    %v2130 = vunpack.c.l.b16 %v1404
    %v2131 = vunpack.c.h.b16 %v1404
    %v2132 = vunpack.c.l.b16 %v1405
    %v2133 = vunpack.c.h.b16 %v1405
    %v2134 = vunpack.c.l.b16 %v1406
    %v2135 = vunpack.c.h.b16 %v1406
    %v2136 = vunpack.c.l.b16 %v1407
    %v2137 = vunpack.c.h.b16 %v1407
    %v2138 = vunpack.c.l.b16 %v1408
    %v2139 = vunpack.c.h.b16 %v1408
    %v2140 = vunpack.c.l.b16 %v1409
    %v2141 = vunpack.c.h.b16 %v1409
    %v2142 = vunpack.c.l.b16 %v1410
    %v2143 = vunpack.c.h.b16 %v1410
    %v2144 = vunpack.c.l.b16 %v1411
    %v2145 = vunpack.c.h.b16 %v1411
    %v2146 = vunpack.c.l.b16 %v1412
    %v2147 = vunpack.c.h.b16 %v1412
    %v2148 = vunpack.c.l.b16 %v1413
    %v2149 = vunpack.c.h.b16 %v1413
    %v2150 = vunpack.c.l.b16 %v1414
    %v2151 = vunpack.c.h.b16 %v1414
    %v2152 = vunpack.c.l.b16 %v1415
    %v2153 = vunpack.c.h.b16 %v1415
    %v2154 = vunpack.c.l.b16 %v1416
    %v2155 = vunpack.c.h.b16 %v1416
    %v2156 = vunpack.c.l.b16 %v1417
    %v2157 = vunpack.c.h.b16 %v1417
    %v2158 = vunpack.c.l.b16 %v1418
    %v2159 = vunpack.c.h.b16 %v1418
    %v2160 = vunpack.c.l.b16 %v1419
    %v2161 = vunpack.c.h.b16 %v1419
    %v2162 = vunpack.c.l.b16 %v1420
    %v2163 = vunpack.c.h.b16 %v1420
    %v2164 = vunpack.c.l.b16 %v1421
    %v2165 = vunpack.c.h.b16 %v1421
    %v2166 = vunpack.c.l.b16 %v1422
    %v2167 = vunpack.c.h.b16 %v1422
    %v2168 = vunpack.c.l.b16 %v1423
    %v2169 = vunpack.c.h.b16 %v1423
    %v2170 = vunpack.c.l.b16 %v1424
    %v2171 = vunpack.c.h.b16 %v1424
    %v2172 = vunpack.c.l.b16 %v1425
    %v2173 = vunpack.c.h.b16 %v1425
    %v2174 = vunpack.c.l.b16 %v1426
    %v2175 = vunpack.c.h.b16 %v1426
    %v2176 = vunpack.c.l.b16 %v1427
    %v2177 = vunpack.c.h.b16 %v1427
    %v2178 = vunpack.c.l.b16 %v1428
    %v2179 = vunpack.c.h.b16 %v1428
    %v2180 = vunpack.c.l.b16 %v1429
    %v2181 = vunpack.c.h.b16 %v1429
    %v2182 = vunpack.c.l.b16 %v1430
    %v2183 = vunpack.c.h.b16 %v1430
    %v2184 = vunpack.c.l.b16 %v1431
    %v2185 = vunpack.c.h.b16 %v1431
    %v2186 = vunpack.c.l.b16 %v1432
    %v2187 = vunpack.c.h.b16 %v1432
    %v2188 = vunpack.c.l.b16 %v1433
    %v2189 = vunpack.c.h.b16 %v1433
    %v2190 = vunpack.c.l.b16 %v1434
    %v2191 = vunpack.c.h.b16 %v1434
    %v2192 = vunpack.c.l.b16 %v1435
    %v2193 = vunpack.c.h.b16 %v1435
    %v2194 = vunpack.c.l.b16 %v1436
    %v2195 = vunpack.c.h.b16 %v1436
    %v2196 = vunpack.c.l.b16 %v1437
    %v2197 = vunpack.c.h.b16 %v1437
    %v2198 = vunpack.c.l.b16 %v1438
    %v2199 = vunpack.c.h.b16 %v1438
    %v2200 = vunpack.c.l.b16 %v1439
    %v2201 = vunpack.c.h.b16 %v1439
    %v2202 = vunpack.c.l.b16 %v1440
    %v2203 = vunpack.c.h.b16 %v1440
    %v2204 = vunpack.c.l.b16 %v1441
    %v2205 = vunpack.c.h.b16 %v1441
    %v2206 = vunpack.c.l.b16 %v1442
    %v2207 = vunpack.c.h.b16 %v1442
    %v2208 = vunpack.c.l.b16 %v1443
    %v2209 = vunpack.c.h.b16 %v1443
    %v2210 = vunpack.c.l.b16 %v1444
    %v2211 = vunpack.c.h.b16 %v1444
    %v2212 = vunpack.c.l.b16 %v1445
    %v2213 = vunpack.c.h.b16 %v1445
    %v2214 = vunpack.c.l.b16 %v1446
    %v2215 = vunpack.c.h.b16 %v1446
    %v2216 = vunpack.c.l.b16 %v1447
    %v2217 = vunpack.c.h.b16 %v1447
    %v2218 = vunpack.c.l.b16 %v1448
    %v2219 = vunpack.c.h.b16 %v1448
    %v2220 = vunpack.c.l.b16 %v1449
    %v2221 = vunpack.c.h.b16 %v1449
    %v2222 = vunpack.c.l.b16 %v1450
    %v2223 = vunpack.c.h.b16 %v1450
    %v2224 = vunpack.c.l.b16 %v1451
    %v2225 = vunpack.c.h.b16 %v1451
    %v2226 = vunpack.c.l.b16 %v1452
    %v2227 = vunpack.c.h.b16 %v1452
    %v2228 = vunpack.c.l.b16 %v1453
    %v2229 = vunpack.c.h.b16 %v1453
    %v2230 = vunpack.c.l.b16 %v1454
    %v2231 = vunpack.c.h.b16 %v1454
    %v2232 = vunpack.c.l.b16 %v1455
    %v2233 = vunpack.c.h.b16 %v1455
    %v2234 = vunpack.c.l.b16 %v1456
    %v2235 = vunpack.c.h.b16 %v1456
    %v2236 = vunpack.c.l.b16 %v1457
    %v2237 = vunpack.c.h.b16 %v1457
    %v2238 = vunpack.c.l.b16 %v1458
    %v2239 = vunpack.c.h.b16 %v1458
    %v2240 = vunpack.c.l.b16 %v1459
    %v2241 = vunpack.c.h.b16 %v1459
    %v2242 = vunpack.c.l.b16 %v1460
    %v2243 = vunpack.c.h.b16 %v1460
    %v2244 = vunpack.c.l.b16 %v1461
    %v2245 = vunpack.c.h.b16 %v1461
    %v2246 = vunpack.c.l.b16 %v1462
    %v2247 = vunpack.c.h.b16 %v1462
    %v2248 = vunpack.c.l.b16 %v1463
    %v2249 = vunpack.c.h.b16 %v1463
    %v2250 = vunpack.c.l.b16 %v1464
    %v2251 = vunpack.c.h.b16 %v1464
    %v2252 = vunpack.c.l.b16 %v1465
    %v2253 = vunpack.c.h.b16 %v1465
    %v2254 = vunpack.c.l.b16 %v1466
    %v2255 = vunpack.c.h.b16 %v1466
    %v2256 = vunpack.c.l.b16 %v1467
    %v2257 = vunpack.c.h.b16 %v1467
    %v2258 = vunpack.c.l.b16 %v1468
    %v2259 = vunpack.c.h.b16 %v1468
    %v2260 = vunpack.c.l.b16 %v1469
    %v2261 = vunpack.c.h.b16 %v1469
    %v2262 = vunpack.c.l.b16 %v1470
    %v2263 = vunpack.c.h.b16 %v1470
    %v2264 = vunpack.c.l.b16 %v1471
    %v2265 = vunpack.c.h.b16 %v1471
    %v2266 = vunpack.c.l.b16 %v1472
    %v2267 = vunpack.c.h.b16 %v1472
    %v2268 = vunpack.c.l.b16 %v1473
    %v2269 = vunpack.c.h.b16 %v1473
    %v2270 = vunpack.c.l.b16 %v1474
    %v2271 = vunpack.c.h.b16 %v1474
    %v2272 = vunpack.c.l.b16 %v1475
    %v2273 = vunpack.c.h.b16 %v1475
    %v2274 = vunpack.c.l.b16 %v1476
    %v2275 = vunpack.c.h.b16 %v1476
    %v2276 = vunpack.c.l.b16 %v1477
    %v2277 = vunpack.c.h.b16 %v1477
    %v2278 = vunpack.c.l.b16 %v1478
    %v2279 = vunpack.c.h.b16 %v1478
    %v2280 = vunpack.c.l.b16 %v1479
    %v2281 = vunpack.c.h.b16 %v1479
    %v2282 = vunpack.c.l.b16 %v1480
    %v2283 = vunpack.c.h.b16 %v1480
    %v2284 = vunpack.c.l.b16 %v1481
    %v2285 = vunpack.c.h.b16 %v1481
    %v2286 = vunpack.c.l.b16 %v1482
    %v2287 = vunpack.c.h.b16 %v1482
    %v2288 = vunpack.c.l.b16 %v1483
    %v2289 = vunpack.c.h.b16 %v1483
    %v2290 = vunpack.c.l.b16 %v1484
    %v2291 = vunpack.c.h.b16 %v1484
    %v2292 = vunpack.c.l.b16 %v1485
    %v2293 = vunpack.c.h.b16 %v1485
    %v2294 = vunpack.c.l.b16 %v1486
    %v2295 = vunpack.c.h.b16 %v1486
    %v2296 = vunpack.c.l.b16 %v1487
    %v2297 = vunpack.c.h.b16 %v1487
    %v2298 = vunpack.c.l.b16 %v1488
    %v2299 = vunpack.c.h.b16 %v1488
    %v2300 = vunpack.c.l.b16 %v1489
    %v2301 = vunpack.c.h.b16 %v1489
    %v2302 = vunpack.c.l.b16 %v1490
    %v2303 = vunpack.c.h.b16 %v1490
    %v2304 = vunpack.c.l.b16 %v1491
    %v2305 = vunpack.c.h.b16 %v1491
    %v2306 = vunpack.c.l.b16 %v1492
    %v2307 = vunpack.c.h.b16 %v1492
    %v2308 = vunpack.c.l.b16 %v1493
    %v2309 = vunpack.c.h.b16 %v1493
    %v2310 = vunpack.c.l.b16 %v1494
    %v2311 = vunpack.c.h.b16 %v1494
    %v2312 = vunpack.c.l.b16 %v1495
    %v2313 = vunpack.c.h.b16 %v1495
    %v2314 = vunpack.c.l.b16 %v1496
    %v2315 = vunpack.c.h.b16 %v1496
    %v2316 = vunpack.c.l.b16 %v1497
    %v2317 = vunpack.c.h.b16 %v1497
    %v2318 = vunpack.c.l.b16 %v1498
    %v2319 = vunpack.c.h.b16 %v1498
    %v2320 = vunpack.c.l.b16 %v1499
    %v2321 = vunpack.c.h.b16 %v1499
    %v2322 = vunpack.c.l.b16 %v1500
    %v2323 = vunpack.c.h.b16 %v1500
    %v2324 = vunpack.c.l.b16 %v1501
    %v2325 = vunpack.c.h.b16 %v1501
    %v2326 = vunpack.c.l.b16 %v1502
    %v2327 = vunpack.c.h.b16 %v1502
    %v2328 = vunpack.c.l.b16 %v1503
    %v2329 = vunpack.c.h.b16 %v1503
    %v2330 = vunpack.c.l.b16 %v1504
    %v2331 = vunpack.c.h.b16 %v1504
    %v2332 = vunpack.c.l.b16 %v1505
    %v2333 = vunpack.c.h.b16 %v1505
    %v2334 = vunpack.c.l.b16 %v1506
    %v2335 = vunpack.c.h.b16 %v1506
    %v2336 = vunpack.c.l.b16 %v1507
    %v2337 = vunpack.c.h.b16 %v1507
    %v2338 = vunpack.c.l.b16 %v1508
    %v2339 = vunpack.c.h.b16 %v1508
    %v2340 = vunpack.c.l.b16 %v1509
    %v2341 = vunpack.c.h.b16 %v1509
    %v2342 = vunpack.c.l.b16 %v1510
    %v2343 = vunpack.c.h.b16 %v1510
    %v2344 = vunpack.c.l.b16 %v1511
    %v2345 = vunpack.c.h.b16 %v1511
    %v2346 = vunpack.c.l.b16 %v1512
    %v2347 = vunpack.c.h.b16 %v1512
    %v2348 = vunpack.c.l.b16 %v1513
    %v2349 = vunpack.c.h.b16 %v1513
    %v2350 = vunpack.c.l.b16 %v1514
    %v2351 = vunpack.c.h.b16 %v1514
    %v2352 = vunpack.c.l.b16 %v1515
    %v2353 = vunpack.c.h.b16 %v1515
    %v2354 = vunpack.c.l.b16 %v1516
    %v2355 = vunpack.c.h.b16 %v1516
    %v2356 = vunpack.c.l.b16 %v1517
    %v2357 = vunpack.c.h.b16 %v1517
    %v2358 = vunpack.c.l.b16 %v1518
    %v2359 = vunpack.c.h.b16 %v1518
    %v2360 = vunpack.c.l.b16 %v1519
    %v2361 = vunpack.c.h.b16 %v1519
    %v2362 = vunpack.c.l.b16 %v1520
    %v2363 = vunpack.c.h.b16 %v1520
    %v2364 = vunpack.c.l.b16 %v1521
    %v2365 = vunpack.c.h.b16 %v1521
    %v2366 = vunpack.c.l.b16 %v1522
    %v2367 = vunpack.c.h.b16 %v1522
    %v2368 = vunpack.c.l.b16 %v1523
    %v2369 = vunpack.c.h.b16 %v1523
    %v2370 = vunpack.c.l.b16 %v1524
    %v2371 = vunpack.c.h.b16 %v1524
    %v2372 = vunpack.c.l.b16 %v1525
    %v2373 = vunpack.c.h.b16 %v1525
    %v2374 = vunpack.c.l.b16 %v1526
    %v2375 = vunpack.c.h.b16 %v1526
    %v2376 = vunpack.c.l.b16 %v1527
    %v2377 = vunpack.c.h.b16 %v1527
    %v2378 = vunpack.c.l.b16 %v1528
    %v2379 = vunpack.c.h.b16 %v1528
    %v2380 = vunpack.c.l.b16 %v1529
    %v2381 = vunpack.c.h.b16 %v1529
    %v2382 = vunpack.c.l.b16 %v1530
    %v2383 = vunpack.c.h.b16 %v1530
    %v2384 = vunpack.c.l.b16 %v1531
    %v2385 = vunpack.c.h.b16 %v1531
    %v2386 = vunpack.c.l.b16 %v1532
    %v2387 = vunpack.c.h.b16 %v1532
    %v2388 = vunpack.c.l.b16 %v1533
    %v2389 = vunpack.c.h.b16 %v1533
    %v2390 = vunpack.c.l.b16 %v1534
    %v2391 = vunpack.c.h.b16 %v1534
    %v2392 = vunpack.c.l.b16 %v1535
    %v2393 = vunpack.c.h.b16 %v1535
    %v2394 = vunpack.c.l.b16 %v1536
    %v2395 = vunpack.c.h.b16 %v1536
    %v2396 = vunpack.c.l.b16 %v1537
    %v2397 = vunpack.c.h.b16 %v1537
    %v2398 = vunpack.c.l.b16 %v1538
    %v2399 = vunpack.c.h.b16 %v1538
    %v2400 = vunpack.c.l.b16 %v1539
    %v2401 = vunpack.c.h.b16 %v1539
    %v2402 = vunpack.c.l.b16 %v1540
    %v2403 = vunpack.c.h.b16 %v1540
    %v2404 = vunpack.c.l.b16 %v1541
    %v2405 = vunpack.c.h.b16 %v1541
    %v2406 = vunpack.c.l.b16 %v1542
    %v2407 = vunpack.c.h.b16 %v1542
    %v2408 = vunpack.c.l.b16 %v1543
    %v2409 = vunpack.c.h.b16 %v1543
    %v2410 = vunpack.c.l.b16 %v1544
    %v2411 = vunpack.c.h.b16 %v1544
    %v2412 = vunpack.c.l.b16 %v1545
    %v2413 = vunpack.c.h.b16 %v1545
    %v2414 = vunpack.c.l.b16 %v1546
    %v2415 = vunpack.c.h.b16 %v1546
    %v2416 = vunpack.c.l.b16 %v1547
    %v2417 = vunpack.c.h.b16 %v1547
    %v2418 = vunpack.c.l.b16 %v1548
    %v2419 = vunpack.c.h.b16 %v1548
    %v2420 = vunpack.c.l.b16 %v1549
    %v2421 = vunpack.c.h.b16 %v1549
    %v2422 = vunpack.c.l.b16 %v1550
    %v2423 = vunpack.c.h.b16 %v1550
    %v2424 = vunpack.c.l.b16 %v1551
    %v2425 = vunpack.c.h.b16 %v1551
    %v2426 = vunpack.c.l.b16 %v1552
    %v2427 = vunpack.c.h.b16 %v1552
    %v2428 = vunpack.c.l.b16 %v1553
    %v2429 = vunpack.c.h.b16 %v1553
    %v2430 = vunpack.c.l.b16 %v1554
    %v2431 = vunpack.c.h.b16 %v1554
    %v2432 = vunpack.c.l.b16 %v1555
    %v2433 = vunpack.c.h.b16 %v1555
    %v2434 = vunpack.c.l.b16 %v1556
    %v2435 = vunpack.c.h.b16 %v1556
    %v2436 = vunpack.c.l.b16 %v1557
    %v2437 = vunpack.c.h.b16 %v1557
    %v2438 = vunpack.c.l.b16 %v1558
    %v2439 = vunpack.c.h.b16 %v1558
    %v2440 = vunpack.c.l.b16 %v1559
    %v2441 = vunpack.c.h.b16 %v1559
    %v2442 = vunpack.c.l.b16 %v1560
    %v2443 = vunpack.c.h.b16 %v1560
    %v2444 = vunpack.c.l.b16 %v1561
    %v2445 = vunpack.c.h.b16 %v1561
    %v2446 = vunpack.c.l.b16 %v1562
    %v2447 = vunpack.c.h.b16 %v1562
    %v2448 = vunpack.c.l.b16 %v1563
    %v2449 = vunpack.c.h.b16 %v1563
    %v2450 = vunpack.c.l.b16 %v1564
    %v2451 = vunpack.c.h.b16 %v1564
    %v2452 = vunpack.c.l.b16 %v1565
    %v2453 = vunpack.c.h.b16 %v1565
    %v2454 = vunpack.c.l.b16 %v1566
    %v2455 = vunpack.c.h.b16 %v1566
    %v2456 = vunpack.c.l.b16 %v1567
    %v2457 = vunpack.c.h.b16 %v1567
    %v2458 = vunpack.c.l.b16 %v1568
    %v2459 = vunpack.c.h.b16 %v1568
    %v2460 = vunpack.c.l.b16 %v1569
    %v2461 = vunpack.c.h.b16 %v1569
    %v2462 = vunpack.c.l.b16 %v1570
    %v2463 = vunpack.c.h.b16 %v1570
    %v2464 = vunpack.c.l.b16 %v1571
    %v2465 = vunpack.c.h.b16 %v1571
    %v2466 = vunpack.c.l.b16 %v1572
    %v2467 = vunpack.c.h.b16 %v1572
    %v2468 = vunpack.c.l.b16 %v1573
    %v2469 = vunpack.c.h.b16 %v1573
    %v2470 = vpack.c.b16 %v1900, %v1894
    %v2471 = vpack.c.b16 %v1901, %v1895
    %v2472 = vpack.c.b16 %v1902, %v1896
    %v2473 = vpack.c.b16 %v1903, %v1897
    %v2474 = vpack.c.b16 %v1904, %v1898
    %v2475 = vpack.c.b16 %v1905, %v1899
    %v2476 = vpack.c.b16 %v1912, %v1906
    %v2477 = vpack.c.b16 %v1913, %v1907
    %v2478 = vpack.c.b16 %v1914, %v1908
    %v2479 = vpack.c.b16 %v1915, %v1909
    %v2480 = vpack.c.b16 %v1916, %v1910
    %v2481 = vpack.c.b16 %v1917, %v1911
    %v2482 = vpack.c.b16 %v1924, %v1918
    %v2483 = vpack.c.b16 %v1925, %v1919
    %v2484 = vpack.c.b16 %v1926, %v1920
    %v2485 = vpack.c.b16 %v1927, %v1921
    %v2486 = vpack.c.b16 %v1928, %v1922
    %v2487 = vpack.c.b16 %v1929, %v1923
    %v2488 = vpack.c.b16 %v1936, %v1930
    %v2489 = vpack.c.b16 %v1937, %v1931
    %v2490 = vpack.c.b16 %v1938, %v1932
    %v2491 = vpack.c.b16 %v1939, %v1933
    %v2492 = vpack.c.b16 %v1940, %v1934
    %v2493 = vpack.c.b16 %v1941, %v1935
    %v2494 = vpack.c.b16 %v1948, %v1942
    %v2495 = vpack.c.b16 %v1949, %v1943
    %v2496 = vpack.c.b16 %v1950, %v1944
    %v2497 = vpack.c.b16 %v1951, %v1945
    %v2498 = vpack.c.b16 %v1952, %v1946
    %v2499 = vpack.c.b16 %v1953, %v1947
    %v2500 = vpack.c.b16 %v1960, %v1954
    %v2501 = vpack.c.b16 %v1961, %v1955
    %v2502 = vpack.c.b16 %v1962, %v1956
    %v2503 = vpack.c.b16 %v1963, %v1957
    %v2504 = vpack.c.b16 %v1964, %v1958
    %v2505 = vpack.c.b16 %v1965, %v1959
    %v2506 = vpack.c.b16 %v1972, %v1966
    %v2507 = vpack.c.b16 %v1973, %v1967
    %v2508 = vpack.c.b16 %v1974, %v1968
    %v2509 = vpack.c.b16 %v1975, %v1969
    %v2510 = vpack.c.b16 %v1976, %v1970
    %v2511 = vpack.c.b16 %v1977, %v1971
    %v2512 = vpack.c.b16 %v1984, %v1978
    %v2513 = vpack.c.b16 %v1985, %v1979
    %v2514 = vpack.c.b16 %v1986, %v1980
    %v2515 = vpack.c.b16 %v1987, %v1981
    %v2516 = vpack.c.b16 %v1988, %v1982
    %v2517 = vpack.c.b16 %v1989, %v1983
    %v2518 = vpack.c.b16 %v1996, %v1990
    %v2519 = vpack.c.b16 %v1997, %v1991
    %v2520 = vpack.c.b16 %v1998, %v1992
    %v2521 = vpack.c.b16 %v1999, %v1993
    %v2522 = vpack.c.b16 %v2000, %v1994
    %v2523 = vpack.c.b16 %v2001, %v1995
    %v2524 = vpack.c.b16 %v2008, %v2002
    %v2525 = vpack.c.b16 %v2009, %v2003
    %v2526 = vpack.c.b16 %v2010, %v2004
    %v2527 = vpack.c.b16 %v2011, %v2005
    %v2528 = vpack.c.b16 %v2012, %v2006
    %v2529 = vpack.c.b16 %v2013, %v2007
    %v2530 = vpack.c.b16 %v2020, %v2014
    %v2531 = vpack.c.b16 %v2021, %v2015
    %v2532 = vpack.c.b16 %v2022, %v2016
    %v2533 = vpack.c.b16 %v2023, %v2017
    %v2534 = vpack.c.b16 %v2024, %v2018
    %v2535 = vpack.c.b16 %v2025, %v2019
    %v2536 = vpack.c.b16 %v2032, %v2026
    %v2537 = vpack.c.b16 %v2033, %v2027
    %v2538 = vpack.c.b16 %v2034, %v2028
    %v2539 = vpack.c.b16 %v2035, %v2029
    %v2540 = vpack.c.b16 %v2036, %v2030
    %v2541 = vpack.c.b16 %v2037, %v2031
    %v2542 = vpack.c.b16 %v2044, %v2038
    %v2543 = vpack.c.b16 %v2045, %v2039
    %v2544 = vpack.c.b16 %v2046, %v2040
    %v2545 = vpack.c.b16 %v2047, %v2041
    %v2546 = vpack.c.b16 %v2048, %v2042
    %v2547 = vpack.c.b16 %v2049, %v2043
    %v2548 = vpack.c.b16 %v2056, %v2050
    %v2549 = vpack.c.b16 %v2057, %v2051
    %v2550 = vpack.c.b16 %v2058, %v2052
    %v2551 = vpack.c.b16 %v2059, %v2053
    %v2552 = vpack.c.b16 %v2060, %v2054
    %v2553 = vpack.c.b16 %v2061, %v2055
    %v2554 = vpack.c.b16 %v2068, %v2062
    %v2555 = vpack.c.b16 %v2069, %v2063
    %v2556 = vpack.c.b16 %v2070, %v2064
    %v2557 = vpack.c.b16 %v2071, %v2065
    %v2558 = vpack.c.b16 %v2072, %v2066
    %v2559 = vpack.c.b16 %v2073, %v2067
    %v2560 = vpack.c.b16 %v2080, %v2074
    %v2561 = vpack.c.b16 %v2081, %v2075
    %v2562 = vpack.c.b16 %v2082, %v2076
    %v2563 = vpack.c.b16 %v2083, %v2077
    %v2564 = vpack.c.b16 %v2084, %v2078
    %v2565 = vpack.c.b16 %v2085, %v2079
    %v2566 = vpack.c.b16 %v2092, %v2086
    %v2567 = vpack.c.b16 %v2093, %v2087
    %v2568 = vpack.c.b16 %v2094, %v2088
    %v2569 = vpack.c.b16 %v2095, %v2089
    %v2570 = vpack.c.b16 %v2096, %v2090
    %v2571 = vpack.c.b16 %v2097, %v2091
    %v2572 = vpack.c.b16 %v2104, %v2098
    %v2573 = vpack.c.b16 %v2105, %v2099
    %v2574 = vpack.c.b16 %v2106, %v2100
    %v2575 = vpack.c.b16 %v2107, %v2101
    %v2576 = vpack.c.b16 %v2108, %v2102
    %v2577 = vpack.c.b16 %v2109, %v2103
    %v2578 = vpack.c.b16 %v2116, %v2110
    %v2579 = vpack.c.b16 %v2117, %v2111
    %v2580 = vpack.c.b16 %v2118, %v2112
    %v2581 = vpack.c.b16 %v2119, %v2113
    %v2582 = vpack.c.b16 %v2120, %v2114
    %v2583 = vpack.c.b16 %v2121, %v2115
    %v2584 = vpack.c.b16 %v2128, %v2122
    %v2585 = vpack.c.b16 %v2129, %v2123
    %v2586 = vpack.c.b16 %v2130, %v2124
    %v2587 = vpack.c.b16 %v2131, %v2125
    %v2588 = vpack.c.b16 %v2132, %v2126
    %v2589 = vpack.c.b16 %v2133, %v2127
    %v2590 = vpack.c.b16 %v2140, %v2134
    %v2591 = vpack.c.b16 %v2141, %v2135
    %v2592 = vpack.c.b16 %v2142, %v2136
    %v2593 = vpack.c.b16 %v2143, %v2137
    %v2594 = vpack.c.b16 %v2144, %v2138
    %v2595 = vpack.c.b16 %v2145, %v2139
    %v2596 = vpack.c.b16 %v2152, %v2146
    %v2597 = vpack.c.b16 %v2153, %v2147
    %v2598 = vpack.c.b16 %v2154, %v2148
    %v2599 = vpack.c.b16 %v2155, %v2149
    %v2600 = vpack.c.b16 %v2156, %v2150
    %v2601 = vpack.c.b16 %v2157, %v2151
    %v2602 = vpack.c.b16 %v2164, %v2158
    %v2603 = vpack.c.b16 %v2165, %v2159
    %v2604 = vpack.c.b16 %v2166, %v2160
    %v2605 = vpack.c.b16 %v2167, %v2161
    %v2606 = vpack.c.b16 %v2168, %v2162
    %v2607 = vpack.c.b16 %v2169, %v2163
    %v2608 = vpack.c.b16 %v2176, %v2170
    %v2609 = vpack.c.b16 %v2177, %v2171
    %v2610 = vpack.c.b16 %v2178, %v2172
    %v2611 = vpack.c.b16 %v2179, %v2173
    %v2612 = vpack.c.b16 %v2180, %v2174
    %v2613 = vpack.c.b16 %v2181, %v2175
    %v2614 = vpack.c.b16 %v2188, %v2182
    %v2615 = vpack.c.b16 %v2189, %v2183
    %v2616 = vpack.c.b16 %v2190, %v2184
    %v2617 = vpack.c.b16 %v2191, %v2185
    %v2618 = vpack.c.b16 %v2192, %v2186
    %v2619 = vpack.c.b16 %v2193, %v2187
    %v2620 = vpack.c.b16 %v2200, %v2194
    %v2621 = vpack.c.b16 %v2201, %v2195
    %v2622 = vpack.c.b16 %v2202, %v2196
    %v2623 = vpack.c.b16 %v2203, %v2197
    %v2624 = vpack.c.b16 %v2204, %v2198
    %v2625 = vpack.c.b16 %v2205, %v2199
    %v2626 = vpack.c.b16 %v2212, %v2206
    %v2627 = vpack.c.b16 %v2213, %v2207
    %v2628 = vpack.c.b16 %v2214, %v2208
    %v2629 = vpack.c.b16 %v2215, %v2209
    %v2630 = vpack.c.b16 %v2216, %v2210
    %v2631 = vpack.c.b16 %v2217, %v2211
    %v2632 = vpack.c.b16 %v2224, %v2218
    %v2633 = vpack.c.b16 %v2225, %v2219
    %v2634 = vpack.c.b16 %v2226, %v2220
    %v2635 = vpack.c.b16 %v2227, %v2221
    %v2636 = vpack.c.b16 %v2228, %v2222
    %v2637 = vpack.c.b16 %v2229, %v2223
    %v2638 = vpack.c.b16 %v2236, %v2230
    %v2639 = vpack.c.b16 %v2237, %v2231
    %v2640 = vpack.c.b16 %v2238, %v2232
    %v2641 = vpack.c.b16 %v2239, %v2233
    %v2642 = vpack.c.b16 %v2240, %v2234
    %v2643 = vpack.c.b16 %v2241, %v2235
    %v2644 = vpack.c.b16 %v2248, %v2242
    %v2645 = vpack.c.b16 %v2249, %v2243
    %v2646 = vpack.c.b16 %v2250, %v2244
    %v2647 = vpack.c.b16 %v2251, %v2245
    %v2648 = vpack.c.b16 %v2252, %v2246
    %v2649 = vpack.c.b16 %v2253, %v2247
    %v2650 = vpack.c.b16 %v2260, %v2254
    %v2651 = vpack.c.b16 %v2261, %v2255
    %v2652 = vpack.c.b16 %v2262, %v2256
    %v2653 = vpack.c.b16 %v2263, %v2257
    %v2654 = vpack.c.b16 %v2264, %v2258
    %v2655 = vpack.c.b16 %v2265, %v2259
    %v2656 = vpack.c.b16 %v2272, %v2266
    %v2657 = vpack.c.b16 %v2273, %v2267
    %v2658 = vpack.c.b16 %v2274, %v2268
    %v2659 = vpack.c.b16 %v2275, %v2269
    %v2660 = vpack.c.b16 %v2276, %v2270
    %v2661 = vpack.c.b16 %v2277, %v2271
    %v2662 = vpack.c.b16 %v2284, %v2278
    %v2663 = vpack.c.b16 %v2285, %v2279
    %v2664 = vpack.c.b16 %v2286, %v2280
    %v2665 = vpack.c.b16 %v2287, %v2281
    %v2666 = vpack.c.b16 %v2288, %v2282
    %v2667 = vpack.c.b16 %v2289, %v2283
    %v2668 = vpack.c.b16 %v2296, %v2290
    %v2669 = vpack.c.b16 %v2297, %v2291
    %v2670 = vpack.c.b16 %v2298, %v2292
    %v2671 = vpack.c.b16 %v2299, %v2293
    %v2672 = vpack.c.b16 %v2300, %v2294
    %v2673 = vpack.c.b16 %v2301, %v2295
    %v2674 = vpack.c.b16 %v2308, %v2302
    %v2675 = vpack.c.b16 %v2309, %v2303
    %v2676 = vpack.c.b16 %v2310, %v2304
    %v2677 = vpack.c.b16 %v2311, %v2305
    %v2678 = vpack.c.b16 %v2312, %v2306
    %v2679 = vpack.c.b16 %v2313, %v2307
    %v2680 = vpack.c.b16 %v2320, %v2314
    %v2681 = vpack.c.b16 %v2321, %v2315
    %v2682 = vpack.c.b16 %v2322, %v2316
    %v2683 = vpack.c.b16 %v2323, %v2317
    %v2684 = vpack.c.b16 %v2324, %v2318
    %v2685 = vpack.c.b16 %v2325, %v2319
    %v2686 = vpack.c.b16 %v2332, %v2326
    %v2687 = vpack.c.b16 %v2333, %v2327
    %v2688 = vpack.c.b16 %v2334, %v2328
    %v2689 = vpack.c.b16 %v2335, %v2329
    %v2690 = vpack.c.b16 %v2336, %v2330
    %v2691 = vpack.c.b16 %v2337, %v2331
    %v2692 = vpack.c.b16 %v2344, %v2338
    %v2693 = vpack.c.b16 %v2345, %v2339
    %v2694 = vpack.c.b16 %v2346, %v2340
    %v2695 = vpack.c.b16 %v2347, %v2341
    %v2696 = vpack.c.b16 %v2348, %v2342
    %v2697 = vpack.c.b16 %v2349, %v2343
    %v2698 = vpack.c.b16 %v2356, %v2350
    %v2699 = vpack.c.b16 %v2357, %v2351
    %v2700 = vpack.c.b16 %v2358, %v2352
    %v2701 = vpack.c.b16 %v2359, %v2353
    %v2702 = vpack.c.b16 %v2360, %v2354
    %v2703 = vpack.c.b16 %v2361, %v2355
    %v2704 = vpack.c.b16 %v2368, %v2362
    %v2705 = vpack.c.b16 %v2369, %v2363
    %v2706 = vpack.c.b16 %v2370, %v2364
    %v2707 = vpack.c.b16 %v2371, %v2365
    %v2708 = vpack.c.b16 %v2372, %v2366
    %v2709 = vpack.c.b16 %v2373, %v2367
    %v2710 = vpack.c.b16 %v2380, %v2374
    %v2711 = vpack.c.b16 %v2381, %v2375
    %v2712 = vpack.c.b16 %v2382, %v2376
    %v2713 = vpack.c.b16 %v2383, %v2377
    %v2714 = vpack.c.b16 %v2384, %v2378
    %v2715 = vpack.c.b16 %v2385, %v2379
    %v2716 = vpack.c.b16 %v2392, %v2386
    %v2717 = vpack.c.b16 %v2393, %v2387
    %v2718 = vpack.c.b16 %v2394, %v2388
    %v2719 = vpack.c.b16 %v2395, %v2389
    %v2720 = vpack.c.b16 %v2396, %v2390
    %v2721 = vpack.c.b16 %v2397, %v2391
    %v2722 = vpack.c.b16 %v2404, %v2398
    %v2723 = vpack.c.b16 %v2405, %v2399
    %v2724 = vpack.c.b16 %v2406, %v2400
    %v2725 = vpack.c.b16 %v2407, %v2401
    %v2726 = vpack.c.b16 %v2408, %v2402
    %v2727 = vpack.c.b16 %v2409, %v2403
    %v2728 = vpack.c.b16 %v2416, %v2410
    %v2729 = vpack.c.b16 %v2417, %v2411
    %v2730 = vpack.c.b16 %v2418, %v2412
    %v2731 = vpack.c.b16 %v2419, %v2413
    %v2732 = vpack.c.b16 %v2420, %v2414
    %v2733 = vpack.c.b16 %v2421, %v2415
    %v2734 = vpack.c.b16 %v2428, %v2422
    %v2735 = vpack.c.b16 %v2429, %v2423
    %v2736 = vpack.c.b16 %v2430, %v2424
    %v2737 = vpack.c.b16 %v2431, %v2425
    %v2738 = vpack.c.b16 %v2432, %v2426
    %v2739 = vpack.c.b16 %v2433, %v2427
    %v2740 = vpack.c.b16 %v2440, %v2434
    %v2741 = vpack.c.b16 %v2441, %v2435
    %v2742 = vpack.c.b16 %v2442, %v2436
    %v2743 = vpack.c.b16 %v2443, %v2437
    %v2744 = vpack.c.b16 %v2444, %v2438
    %v2745 = vpack.c.b16 %v2445, %v2439
    %v2746 = vpack.c.b16 %v2452, %v2446
    %v2747 = vpack.c.b16 %v2453, %v2447
    %v2748 = vpack.c.b16 %v2454, %v2448
    %v2749 = vpack.c.b16 %v2455, %v2449
    %v2750 = vpack.c.b16 %v2456, %v2450
    %v2751 = vpack.c.b16 %v2457, %v2451
    %v2752 = vpack.c.b16 %v2464, %v2458
    %v2753 = vpack.c.b16 %v2465, %v2459
    %v2754 = vpack.c.b16 %v2466, %v2460
    %v2755 = vpack.c.b16 %v2467, %v2461
    %v2756 = vpack.c.b16 %v2468, %v2462
    %v2757 = vpack.c.b16 %v2469, %v2463
    %3046 = vmatprep.subr.bf16.mxu0 %v2471
    %3047 = vmatpush1.bf16.msra.mxu0 %v2470
    %3048 = vmatprep.subr.bf16.mxu0 %v2477
    %3049 = vmatpush1.bf16.msra.mxu0 %v2476
    %3050 = vmatprep.subr.bf16.mxu0 %v2483
    %3051 = vmatpush1.bf16.msra.mxu0 %v2482
    %3052 = vmatprep.subr.bf16.mxu0 %v2489
    %3053 = vmatpush1.bf16.msra.mxu0 %v2488
    %3054 = vmatprep.subr.bf16.mxu0 %v2495
    %3055 = vmatpush1.bf16.msra.mxu0 %v2494
    %3056 = vmatprep.subr.bf16.mxu0 %v2501
    %3057 = vmatpush1.bf16.msra.mxu0 %v2500
    %3058 = vmatprep.subr.bf16.mxu0 %v2507
    %3059 = vmatpush1.bf16.msra.mxu0 %v2506
    %3060 = vmatprep.subr.bf16.mxu0 %v2513
    %3061 = vmatpush1.bf16.msra.mxu0 %v2512
    %3062 = vmatprep.subr.bf16.mxu0 %v2519
    %3063 = vmatpush1.bf16.msra.mxu0 %v2518
    %3064 = vmatprep.subr.bf16.mxu0 %v2525
    %3065 = vmatpush1.bf16.msra.mxu0 %v2524
    %3066 = vmatprep.subr.bf16.mxu0 %v2531
    %3067 = vmatpush1.bf16.msra.mxu0 %v2530
    %3068 = vmatprep.subr.bf16.mxu0 %v2537
    %3069 = vmatpush1.bf16.msra.mxu0 %v2536
    %3070 = vmatprep.subr.bf16.mxu0 %v2543
    %3071 = vmatpush1.bf16.msra.mxu0 %v2542
    %3072 = vmatprep.subr.bf16.mxu0 %v2549
    %3073 = vmatpush1.bf16.msra.mxu0 %v2548
    %3074 = vmatprep.subr.bf16.mxu0 %v2555
    %3075 = vmatpush1.bf16.msra.mxu0 %v2554
    %3076 = vmatprep.subr.bf16.mxu0 %v2561
    %3077 = vmatpush1.bf16.msra.mxu0 %v2560
    %3078 = vmatprep.mubr.bf16.mxu0 %v1281
    %3079 = vmatmul.mubr.bf16.gmra.mrb[0].mxu0 %v1280
    %v3080 = vpop.f32.mrb[0].mxu0
    %v3081 = vadd.f32 %v1579, %v3080
    %v3082 = vpop.f32.mrb[0].mxu0
    %v3083 = vadd.f32 %v1583, %v3082
    %v3084 = vpop.f32.mrb[0].mxu0
    %v3085 = vadd.f32 %v1579, %v3084
    %v3086 = vpop.f32.mrb[0].mxu0
    %v3087 = vadd.f32 %v1583, %v3086
    %3088 = vdwg.mxu0
    %3089 = vmatprep.subr.bf16.mxu0 %v2567
    %3090 = vmatpush1.bf16.msra.mxu0 %v2566
    %3091 = vmatprep.subr.bf16.mxu0 %v2573
    %3092 = vmatpush1.bf16.msra.mxu0 %v2572
    %3093 = vmatprep.subr.bf16.mxu0 %v2579
    %3094 = vmatpush1.bf16.msra.mxu0 %v2578
    %3095 = vmatprep.subr.bf16.mxu0 %v2585
    %3096 = vmatpush1.bf16.msra.mxu0 %v2584
    %3097 = vmatprep.subr.bf16.mxu0 %v2591
    %3098 = vmatpush1.bf16.msra.mxu0 %v2590
    %3099 = vmatprep.subr.bf16.mxu0 %v2597
    %3100 = vmatpush1.bf16.msra.mxu0 %v2596
    %3101 = vmatprep.subr.bf16.mxu0 %v2603
    %3102 = vmatpush1.bf16.msra.mxu0 %v2602
    %3103 = vmatprep.subr.bf16.mxu0 %v2609
    %3104 = vmatpush1.bf16.msra.mxu0 %v2608
    %3105 = vmatprep.subr.bf16.mxu0 %v2615
    %3106 = vmatpush1.bf16.msra.mxu0 %v2614
    %3107 = vmatprep.subr.bf16.mxu0 %v2621
    %3108 = vmatpush1.bf16.msra.mxu0 %v2620
    %3109 = vmatprep.subr.bf16.mxu0 %v2627
    %3110 = vmatpush1.bf16.msra.mxu0 %v2626
    %3111 = vmatprep.subr.bf16.mxu0 %v2633
    %3112 = vmatpush1.bf16.msra.mxu0 %v2632
    %3113 = vmatprep.subr.bf16.mxu0 %v2639
    %3114 = vmatpush1.bf16.msra.mxu0 %v2638
    %3115 = vmatprep.subr.bf16.mxu0 %v2645
    %3116 = vmatpush1.bf16.msra.mxu0 %v2644
    %3117 = vmatprep.subr.bf16.mxu0 %v2651
    %3118 = vmatpush1.bf16.msra.mxu0 %v2650
    %3119 = vmatprep.subr.bf16.mxu0 %v2657
    %3120 = vmatpush1.bf16.msra.mxu0 %v2656
    %3121 = vmatprep.mubr.bf16.mxu0 %v1283
    %3122 = vmatmul.mubr.bf16.gmra.mrb[0].mxu0 %v1282
    %v3123 = vpop.f32.mrb[0].mxu0
    %v3124 = vadd.f32 %v3081, %v3123
    %v3125 = vpop.f32.mrb[0].mxu0
    %v3126 = vadd.f32 %v3083, %v3125
    %v3127 = vpop.f32.mrb[0].mxu0
    %v3128 = vadd.f32 %v3085, %v3127
    %v3129 = vpop.f32.mrb[0].mxu0
    %v3130 = vadd.f32 %v3087, %v3129
    %3131 = vdwg.mxu0
    %3132 = vmatprep.subr.bf16.mxu0 %v2663
    %3133 = vmatpush1.bf16.msra.mxu0 %v2662
    %3134 = vmatprep.subr.bf16.mxu0 %v2669
    %3135 = vmatpush1.bf16.msra.mxu0 %v2668
    %3136 = vmatprep.subr.bf16.mxu0 %v2675
    %3137 = vmatpush1.bf16.msra.mxu0 %v2674
    %3138 = vmatprep.subr.bf16.mxu0 %v2681
    %3139 = vmatpush1.bf16.msra.mxu0 %v2680
    %3140 = vmatprep.subr.bf16.mxu0 %v2687
    %3141 = vmatpush1.bf16.msra.mxu0 %v2686
    %3142 = vmatprep.subr.bf16.mxu0 %v2693
    %3143 = vmatpush1.bf16.msra.mxu0 %v2692
    %3144 = vmatprep.subr.bf16.mxu0 %v2699
    %3145 = vmatpush1.bf16.msra.mxu0 %v2698
    %3146 = vmatprep.subr.bf16.mxu0 %v2705
    %3147 = vmatpush1.bf16.msra.mxu0 %v2704
    %3148 = vmatprep.subr.bf16.mxu0 %v2711
    %3149 = vmatpush1.bf16.msra.mxu0 %v2710
    %3150 = vmatprep.subr.bf16.mxu0 %v2717
    %3151 = vmatpush1.bf16.msra.mxu0 %v2716
    %3152 = vmatprep.subr.bf16.mxu0 %v2723
    %3153 = vmatpush1.bf16.msra.mxu0 %v2722
    %3154 = vmatprep.subr.bf16.mxu0 %v2729
    %3155 = vmatpush1.bf16.msra.mxu0 %v2728
    %3156 = vmatprep.subr.bf16.mxu0 %v2735
    %3157 = vmatpush1.bf16.msra.mxu0 %v2734
    %3158 = vmatprep.subr.bf16.mxu0 %v2741
    %3159 = vmatpush1.bf16.msra.mxu0 %v2740
    %3160 = vmatprep.subr.bf16.mxu0 %v2747
    %3161 = vmatpush1.bf16.msra.mxu0 %v2746
    %3162 = vmatprep.subr.bf16.mxu0 %v2753
    %3163 = vmatpush1.bf16.msra.mxu0 %v2752
    %3164 = vmatprep.mubr.bf16.mxu0 %v1285
    %3165 = vmatmul.mubr.bf16.gmra.mrb[0].mxu0 %v1284
    %v3166 = vpop.f32.mrb[0].mxu0
    %v3167 = vadd.f32 %v3124, %v3166
    %v3168 = vpop.f32.mrb[0].mxu0
    %v3169 = vadd.f32 %v3126, %v3168
    %v3170 = vpop.f32.mrb[0].mxu0
    %v3171 = vadd.f32 %v3128, %v3170
    %v3172 = vpop.f32.mrb[0].mxu0
    %v3173 = vadd.f32 %v3130, %v3172
    %3174 = vdwg.mxu0
    %3175 = vmatprep.subr.bf16.mxu0 %v2473
    %3176 = vmatpush1.bf16.msra.mxu0 %v2472
    %3177 = vmatprep.subr.bf16.mxu0 %v2479
    %3178 = vmatpush1.bf16.msra.mxu0 %v2478
    %3179 = vmatprep.subr.bf16.mxu0 %v2485
    %3180 = vmatpush1.bf16.msra.mxu0 %v2484
    %3181 = vmatprep.subr.bf16.mxu0 %v2491
    %3182 = vmatpush1.bf16.msra.mxu0 %v2490
    %3183 = vmatprep.subr.bf16.mxu0 %v2497
    %3184 = vmatpush1.bf16.msra.mxu0 %v2496
    %3185 = vmatprep.subr.bf16.mxu0 %v2503
    %3186 = vmatpush1.bf16.msra.mxu0 %v2502
    %3187 = vmatprep.subr.bf16.mxu0 %v2509
    %3188 = vmatpush1.bf16.msra.mxu0 %v2508
    %3189 = vmatprep.subr.bf16.mxu0 %v2515
    %3190 = vmatpush1.bf16.msra.mxu0 %v2514
    %3191 = vmatprep.subr.bf16.mxu0 %v2521
    %3192 = vmatpush1.bf16.msra.mxu0 %v2520
    %3193 = vmatprep.subr.bf16.mxu0 %v2527
    %3194 = vmatpush1.bf16.msra.mxu0 %v2526
    %3195 = vmatprep.subr.bf16.mxu0 %v2533
    %3196 = vmatpush1.bf16.msra.mxu0 %v2532
    %3197 = vmatprep.subr.bf16.mxu0 %v2539
    %3198 = vmatpush1.bf16.msra.mxu0 %v2538
    %3199 = vmatprep.subr.bf16.mxu0 %v2545
    %3200 = vmatpush1.bf16.msra.mxu0 %v2544
    %3201 = vmatprep.subr.bf16.mxu0 %v2551
    %3202 = vmatpush1.bf16.msra.mxu0 %v2550
    %3203 = vmatprep.subr.bf16.mxu0 %v2557
    %3204 = vmatpush1.bf16.msra.mxu0 %v2556
    %3205 = vmatprep.subr.bf16.mxu0 %v2563
    %3206 = vmatpush1.bf16.msra.mxu0 %v2562
    %3207 = vmatprep.mubr.bf16.mxu0 %v1281
    %3208 = vmatmul.mubr.bf16.gmra.mrb[0].mxu0 %v1280
    %v3209 = vpop.f32.mrb[0].mxu0
    %v3210 = vadd.f32 %v1587, %v3209
    %v3211 = vpop.f32.mrb[0].mxu0
    %v3212 = vadd.f32 %v1591, %v3211
    %v3213 = vpop.f32.mrb[0].mxu0
    %v3214 = vadd.f32 %v1587, %v3213
    %v3215 = vpop.f32.mrb[0].mxu0
    %v3216 = vadd.f32 %v1591, %v3215
    %3217 = vdwg.mxu0
    %3218 = vmatprep.subr.bf16.mxu0 %v2569
    %3219 = vmatpush1.bf16.msra.mxu0 %v2568
    %3220 = vmatprep.subr.bf16.mxu0 %v2575
    %3221 = vmatpush1.bf16.msra.mxu0 %v2574
    %3222 = vmatprep.subr.bf16.mxu0 %v2581
    %3223 = vmatpush1.bf16.msra.mxu0 %v2580
    %3224 = vmatprep.subr.bf16.mxu0 %v2587
    %3225 = vmatpush1.bf16.msra.mxu0 %v2586
    %3226 = vmatprep.subr.bf16.mxu0 %v2593
    %3227 = vmatpush1.bf16.msra.mxu0 %v2592
    %3228 = vmatprep.subr.bf16.mxu0 %v2599
    %3229 = vmatpush1.bf16.msra.mxu0 %v2598
    %3230 = vmatprep.subr.bf16.mxu0 %v2605
    %3231 = vmatpush1.bf16.msra.mxu0 %v2604
    %3232 = vmatprep.subr.bf16.mxu0 %v2611
    %3233 = vmatpush1.bf16.msra.mxu0 %v2610
    %3234 = vmatprep.subr.bf16.mxu0 %v2617
    %3235 = vmatpush1.bf16.msra.mxu0 %v2616
    %3236 = vmatprep.subr.bf16.mxu0 %v2623
    %3237 = vmatpush1.bf16.msra.mxu0 %v2622
    %3238 = vmatprep.subr.bf16.mxu0 %v2629
    %3239 = vmatpush1.bf16.msra.mxu0 %v2628
    %3240 = vmatprep.subr.bf16.mxu0 %v2635
    %3241 = vmatpush1.bf16.msra.mxu0 %v2634
    %3242 = vmatprep.subr.bf16.mxu0 %v2641
    %3243 = vmatpush1.bf16.msra.mxu0 %v2640
    %3244 = vmatprep.subr.bf16.mxu0 %v2647
    %3245 = vmatpush1.bf16.msra.mxu0 %v2646
    %3246 = vmatprep.subr.bf16.mxu0 %v2653
    %3247 = vmatpush1.bf16.msra.mxu0 %v2652
    %3248 = vmatprep.subr.bf16.mxu0 %v2659
    %3249 = vmatpush1.bf16.msra.mxu0 %v2658
    %3250 = vmatprep.mubr.bf16.mxu0 %v1283
    %3251 = vmatmul.mubr.bf16.gmra.mrb[0].mxu0 %v1282
    %v3252 = vpop.f32.mrb[0].mxu0
    %v3253 = vadd.f32 %v3210, %v3252
    %v3254 = vpop.f32.mrb[0].mxu0
    %v3255 = vadd.f32 %v3212, %v3254
    %v3256 = vpop.f32.mrb[0].mxu0
    %v3257 = vadd.f32 %v3214, %v3256
    %v3258 = vpop.f32.mrb[0].mxu0
    %v3259 = vadd.f32 %v3216, %v3258
    %3260 = vdwg.mxu0
    %3261 = vmatprep.subr.bf16.mxu0 %v2665
    %3262 = vmatpush1.bf16.msra.mxu0 %v2664
    %3263 = vmatprep.subr.bf16.mxu0 %v2671
    %3264 = vmatpush1.bf16.msra.mxu0 %v2670
    %3265 = vmatprep.subr.bf16.mxu0 %v2677
    %3266 = vmatpush1.bf16.msra.mxu0 %v2676
    %3267 = vmatprep.subr.bf16.mxu0 %v2683
    %3268 = vmatpush1.bf16.msra.mxu0 %v2682
    %3269 = vmatprep.subr.bf16.mxu0 %v2689
    %3270 = vmatpush1.bf16.msra.mxu0 %v2688
    %3271 = vmatprep.subr.bf16.mxu0 %v2695
    %3272 = vmatpush1.bf16.msra.mxu0 %v2694
    %3273 = vmatprep.subr.bf16.mxu0 %v2701
    %3274 = vmatpush1.bf16.msra.mxu0 %v2700
    %3275 = vmatprep.subr.bf16.mxu0 %v2707
    %3276 = vmatpush1.bf16.msra.mxu0 %v2706
    %3277 = vmatprep.subr.bf16.mxu0 %v2713
    %3278 = vmatpush1.bf16.msra.mxu0 %v2712
    %3279 = vmatprep.subr.bf16.mxu0 %v2719
    %3280 = vmatpush1.bf16.msra.mxu0 %v2718
    %3281 = vmatprep.subr.bf16.mxu0 %v2725
    %3282 = vmatpush1.bf16.msra.mxu0 %v2724
    %3283 = vmatprep.subr.bf16.mxu0 %v2731
    %3284 = vmatpush1.bf16.msra.mxu0 %v2730
    %3285 = vmatprep.subr.bf16.mxu0 %v2737
    %3286 = vmatpush1.bf16.msra.mxu0 %v2736
    %3287 = vmatprep.subr.bf16.mxu0 %v2743
    %3288 = vmatpush1.bf16.msra.mxu0 %v2742
    %3289 = vmatprep.subr.bf16.mxu0 %v2749
    %3290 = vmatpush1.bf16.msra.mxu0 %v2748
    %3291 = vmatprep.subr.bf16.mxu0 %v2755
    %3292 = vmatpush1.bf16.msra.mxu0 %v2754
    %3293 = vmatprep.mubr.bf16.mxu0 %v1285
    %3294 = vmatmul.mubr.bf16.gmra.mrb[0].mxu0 %v1284
    %v3295 = vpop.f32.mrb[0].mxu0
    %v3296 = vadd.f32 %v3253, %v3295
    %v3297 = vpop.f32.mrb[0].mxu0
    %v3298 = vadd.f32 %v3255, %v3297
    %v3299 = vpop.f32.mrb[0].mxu0
    %v3300 = vadd.f32 %v3257, %v3299
    %v3301 = vpop.f32.mrb[0].mxu0
    %v3302 = vadd.f32 %v3259, %v3301
    %3303 = vdwg.mxu0
    %3304 = vmatprep.subr.bf16.mxu0 %v2475
    %3305 = vmatpush1.bf16.msra.mxu0 %v2474
    %3306 = vmatprep.subr.bf16.mxu0 %v2481
    %3307 = vmatpush1.bf16.msra.mxu0 %v2480
    %3308 = vmatprep.subr.bf16.mxu0 %v2487
    %3309 = vmatpush1.bf16.msra.mxu0 %v2486
    %3310 = vmatprep.subr.bf16.mxu0 %v2493
    %3311 = vmatpush1.bf16.msra.mxu0 %v2492
    %3312 = vmatprep.subr.bf16.mxu0 %v2499
    %3313 = vmatpush1.bf16.msra.mxu0 %v2498
    %3314 = vmatprep.subr.bf16.mxu0 %v2505
    %3315 = vmatpush1.bf16.msra.mxu0 %v2504
    %3316 = vmatprep.subr.bf16.mxu0 %v2511
    %3317 = vmatpush1.bf16.msra.mxu0 %v2510
    %3318 = vmatprep.subr.bf16.mxu0 %v2517
    %3319 = vmatpush1.bf16.msra.mxu0 %v2516
    %3320 = vmatprep.subr.bf16.mxu0 %v2523
    %3321 = vmatpush1.bf16.msra.mxu0 %v2522
    %3322 = vmatprep.subr.bf16.mxu0 %v2529
    %3323 = vmatpush1.bf16.msra.mxu0 %v2528
    %3324 = vmatprep.subr.bf16.mxu0 %v2535
    %3325 = vmatpush1.bf16.msra.mxu0 %v2534
    %3326 = vmatprep.subr.bf16.mxu0 %v2541
    %3327 = vmatpush1.bf16.msra.mxu0 %v2540
    %3328 = vmatprep.subr.bf16.mxu0 %v2547
    %3329 = vmatpush1.bf16.msra.mxu0 %v2546
    %3330 = vmatprep.subr.bf16.mxu0 %v2553
    %3331 = vmatpush1.bf16.msra.mxu0 %v2552
    %3332 = vmatprep.subr.bf16.mxu0 %v2559
    %3333 = vmatpush1.bf16.msra.mxu0 %v2558
    %3334 = vmatprep.subr.bf16.mxu0 %v2565
    %3335 = vmatpush1.bf16.msra.mxu0 %v2564
    %3336 = vmatprep.mubr.bf16.mxu0 %v1281
    %3337 = vmatmul.mubr.bf16.gmra.mrb[0].mxu0 %v1280
    %v3338 = vpop.f32.mrb[0].mxu0
    %v3339 = vadd.f32 %v1595, %v3338
    %v3340 = vpop.f32.mrb[0].mxu0
    %v3341 = vadd.f32 %v1599, %v3340
    %v3342 = vpop.f32.mrb[0].mxu0
    %v3343 = vadd.f32 %v1595, %v3342
    %v3344 = vpop.f32.mrb[0].mxu0
    %v3345 = vadd.f32 %v1599, %v3344
    %3346 = vdwg.mxu0
    %3347 = vmatprep.subr.bf16.mxu0 %v2571
    %3348 = vmatpush1.bf16.msra.mxu0 %v2570
    %3349 = vmatprep.subr.bf16.mxu0 %v2577
    %3350 = vmatpush1.bf16.msra.mxu0 %v2576
    %3351 = vmatprep.subr.bf16.mxu0 %v2583
    %3352 = vmatpush1.bf16.msra.mxu0 %v2582
    %3353 = vmatprep.subr.bf16.mxu0 %v2589
    %3354 = vmatpush1.bf16.msra.mxu0 %v2588
    %3355 = vmatprep.subr.bf16.mxu0 %v2595
    %3356 = vmatpush1.bf16.msra.mxu0 %v2594
    %3357 = vmatprep.subr.bf16.mxu0 %v2601
    %3358 = vmatpush1.bf16.msra.mxu0 %v2600
    %3359 = vmatprep.subr.bf16.mxu0 %v2607
    %3360 = vmatpush1.bf16.msra.mxu0 %v2606
    %3361 = vmatprep.subr.bf16.mxu0 %v2613
    %3362 = vmatpush1.bf16.msra.mxu0 %v2612
    %3363 = vmatprep.subr.bf16.mxu0 %v2619
    %3364 = vmatpush1.bf16.msra.mxu0 %v2618
    %3365 = vmatprep.subr.bf16.mxu0 %v2625
    %3366 = vmatpush1.bf16.msra.mxu0 %v2624
    %3367 = vmatprep.subr.bf16.mxu0 %v2631
    %3368 = vmatpush1.bf16.msra.mxu0 %v2630
    %3369 = vmatprep.subr.bf16.mxu0 %v2637
    %3370 = vmatpush1.bf16.msra.mxu0 %v2636
    %3371 = vmatprep.subr.bf16.mxu0 %v2643
    %3372 = vmatpush1.bf16.msra.mxu0 %v2642
    %3373 = vmatprep.subr.bf16.mxu0 %v2649
    %3374 = vmatpush1.bf16.msra.mxu0 %v2648
    %3375 = vmatprep.subr.bf16.mxu0 %v2655
    %3376 = vmatpush1.bf16.msra.mxu0 %v2654
    %3377 = vmatprep.subr.bf16.mxu0 %v2661
    %3378 = vmatpush1.bf16.msra.mxu0 %v2660
    %3379 = vmatprep.mubr.bf16.mxu0 %v1283
    %3380 = vmatmul.mubr.bf16.gmra.mrb[0].mxu0 %v1282
    %v3381 = vpop.f32.mrb[0].mxu0
    %v3382 = vadd.f32 %v3339, %v3381
    %v3383 = vpop.f32.mrb[0].mxu0
    %v3384 = vadd.f32 %v3341, %v3383
    %v3385 = vpop.f32.mrb[0].mxu0
    %v3386 = vadd.f32 %v3343, %v3385
    %v3387 = vpop.f32.mrb[0].mxu0
    %v3388 = vadd.f32 %v3345, %v3387
    %3389 = vdwg.mxu0
    %3390 = vmatprep.subr.bf16.mxu0 %v2667
    %3391 = vmatpush1.bf16.msra.mxu0 %v2666
    %3392 = vmatprep.subr.bf16.mxu0 %v2673
    %3393 = vmatpush1.bf16.msra.mxu0 %v2672
    %3394 = vmatprep.subr.bf16.mxu0 %v2679
    %3395 = vmatpush1.bf16.msra.mxu0 %v2678
    %3396 = vmatprep.subr.bf16.mxu0 %v2685
    %3397 = vmatpush1.bf16.msra.mxu0 %v2684
    %3398 = vmatprep.subr.bf16.mxu0 %v2691
    %3399 = vmatpush1.bf16.msra.mxu0 %v2690
    %3400 = vmatprep.subr.bf16.mxu0 %v2697
    %3401 = vmatpush1.bf16.msra.mxu0 %v2696
    %3402 = vmatprep.subr.bf16.mxu0 %v2703
    %3403 = vmatpush1.bf16.msra.mxu0 %v2702
    %3404 = vmatprep.subr.bf16.mxu0 %v2709
    %3405 = vmatpush1.bf16.msra.mxu0 %v2708
    %3406 = vmatprep.subr.bf16.mxu0 %v2715
    %3407 = vmatpush1.bf16.msra.mxu0 %v2714
    %3408 = vmatprep.subr.bf16.mxu0 %v2721
    %3409 = vmatpush1.bf16.msra.mxu0 %v2720
    %3410 = vmatprep.subr.bf16.mxu0 %v2727
    %3411 = vmatpush1.bf16.msra.mxu0 %v2726
    %3412 = vmatprep.subr.bf16.mxu0 %v2733
    %3413 = vmatpush1.bf16.msra.mxu0 %v2732
    %3414 = vmatprep.subr.bf16.mxu0 %v2739
    %3415 = vmatpush1.bf16.msra.mxu0 %v2738
    %3416 = vmatprep.subr.bf16.mxu0 %v2745
    %3417 = vmatpush1.bf16.msra.mxu0 %v2744
    %3418 = vmatprep.subr.bf16.mxu0 %v2751
    %3419 = vmatpush1.bf16.msra.mxu0 %v2750
    %3420 = vmatprep.subr.bf16.mxu0 %v2757
    %3421 = vmatpush1.bf16.msra.mxu0 %v2756
    %3422 = vmatprep.mubr.bf16.mxu0 %v1285
    %3423 = vmatmul.mubr.bf16.gmra.mrb[0].mxu0 %v1284
    %v3424 = vpop.f32.mrb[0].mxu0
    %v3425 = vadd.f32 %v3382, %v3424
    %v3426 = vpop.f32.mrb[0].mxu0
    %v3427 = vadd.f32 %v3384, %v3426
    %v3428 = vpop.f32.mrb[0].mxu0
    %v3429 = vadd.f32 %v3386, %v3428
    %v3430 = vpop.f32.mrb[0].mxu0
    %v3431 = vadd.f32 %v3388, %v3430
    %3432 = vdwg.mxu0
    %v3433 = vmax.f32 %v3167, 0.0
    %v3434 = vmax.f32 %v3169, 0.0
    %v3435 = vmax.f32 %v3296, 0.0
    %v3436 = vmax.f32 %v3298, 0.0
    %v3437 = vmax.f32 %v3425, 0.0
    %v3438 = vmax.f32 %v3427, 0.0
    %v3439 = vmax.f32 %v3171, 0.0
    %v3440 = vmax.f32 %v3173, 0.0
    %v3441 = vmax.f32 %v3300, 0.0
    %v3442 = vmax.f32 %v3302, 0.0
    %v3443 = vmax.f32 %v3429, 0.0
    %v3444 = vmax.f32 %v3431, 0.0
    %v3445 = vadd.f32 %v3433, %v1268
    %v3446 = vadd.f32 %v3434, %v1269
    %v3447 = vadd.f32 %v3435, %v1270
    %v3448 = vadd.f32 %v3436, %v1271
    %v3449 = vadd.f32 %v3437, %v1272
    %v3450 = vadd.f32 %v3438, %v1273
    %v3451 = vadd.f32 %v3439, %v1274
    %v3452 = vadd.f32 %v3440, %v1275
    %v3453 = vadd.f32 %v3441, %v1276
    %v3454 = vadd.f32 %v3442, %v1277
    %v3455 = vadd.f32 %v3443, %v1278
    %v3456 = vadd.f32 %v3444, %v1279
    %v3457 = vld [vmem:[#allocation11] sm:$0x3f]
    %v3459 = vlaneseq
    %v3460 = vshrl.u32 %v3459, 7
    %v3461 = vsub.s32 0, %v3460
    %v3462 = vrot.slane %v3457, %v3461
    %v3463 = vlaneseq
    %v3464 = vshrl.u32 %v3463, 7
    %v3465 = vsub.s32 1, %v3464
    %v3466 = vrot.slane %v3457, %v3465
    %v3467 = vlaneseq
    %v3468 = vshrl.u32 %v3467, 7
    %v3469 = vsub.s32 2, %v3468
    %v3470 = vrot.slane %v3457, %v3469
    %v3471 = vlaneseq
    %v3472 = vshrl.u32 %v3471, 7
    %v3473 = vsub.s32 3, %v3472
    %v3474 = vrot.slane %v3457, %v3473
    %v3475 = vlaneseq
    %v3476 = vshrl.u32 %v3475, 7
    %v3477 = vsub.s32 4, %v3476
    %v3478 = vrot.slane %v3457, %v3477
    %v3479 = vlaneseq
    %v3480 = vshrl.u32 %v3479, 7
    %v3481 = vsub.s32 5, %v3480
    %v3482 = vrot.slane %v3457, %v3481
    %v3489 = vmul.f32 %v3445, %v3462
    %v3490 = vmul.f32 %v3446, %v3466
    %v3491 = vmul.f32 %v3447, %v3470
    %v3492 = vmul.f32 %v3448, %v3474
    %v3493 = vmul.f32 %v3449, %v3478
    %v3494 = vmul.f32 %v3450, %v3482
    %v3495 = vmul.f32 %v3451, %v3462
    %v3496 = vmul.f32 %v3452, %v3466
    %v3497 = vmul.f32 %v3453, %v3470
    %v3498 = vmul.f32 %v3454, %v3474
    %v3499 = vmul.f32 %v3455, %v3478
    %v3500 = vmul.f32 %v3456, %v3482
    %v3501 = vadd.f32 %v3489, %v3490
    %v3502 = vadd.f32 %v3501, %v3491
    %v3503 = vadd.f32 %v3502, %v3492
    %v3504 = vadd.f32 %v3503, %v3493
    %v3505 = vadd.f32 %v3504, %v3494
    %3506 = vadd.xlane.f32.xlu0 %v3505
    %v3507 = vpop.xlane.xlu0 %3506
    %v3508 = vadd.f32 %v3495, %v3496
    %v3509 = vadd.f32 %v3508, %v3497
    %v3510 = vadd.f32 %v3509, %v3498
    %v3511 = vadd.f32 %v3510, %v3499
    %v3512 = vadd.f32 %v3511, %v3500
    %3513 = vadd.xlane.f32.xlu0 %v3512
    %v3514 = vpop.xlane.xlu0 %3513
    %v3515 = vld [vmem:[#allocation2] sm:$0x1]
    %v3517 = vlaneseq
    %v3518 = vshrl.u32 %v3517, 7
    %v3519 = vsub.s32 0, %v3518
    %v3520 = vrot.slane %v3515, %v3519
    %v3522 = vadd.f32 %v3507, %v3520
    %v3523 = vadd.f32 %v3514, %v3520
    %v3524 = vxor.u32 %v3522, 2147483648
    %v3525 = vxor.u32 %v3523, 2147483648
    %v3526 = vmul.f32 %v3524, 1.442695
    %v3527 = vpow.pop %v3526
    %v3528 = vmul.f32 %v3525, 1.442695
    %v3529 = vpow.pop %v3528
    %v3530 = vadd.f32 %v3527, 1.0
    %v3531 = vadd.f32 %v3529, 1.0
    %v3532 = vrcp.pop %v3530
    %v3533 = vmul.f32 1.0, %v3532
    %v3534 = vrcp.pop %v3531
    %v3535 = vmul.f32 1.0, %v3534
    %vm3536 = vcmask 7168
    %3537 = vst.msk [vmem:[%s7] sm:$0xff] %vm3536, %v3533
    %3538 = vst.msk [vmem:[%s7 + $0x8] sm:$0xff] %vm3536, %v3535
    // Predicated region
    $region54: #{tpu_custom_call.1} parent=1 // pred_check
      _
    $region55: #{tpu_custom_call.1} parent=1 // pred_check_branch
      %3540 = sbr.rel (0) target = $region57
    $region56: #{tpu_custom_call.1} parent=1 // pred_region
      _
    $region57: #{tpu_custom_call.1} parent=1 // pred_fallthru
      _
    // Predicated region
    $region58: #{tpu_custom_call.1} parent=1 // pred_check
      _
    $region59: #{tpu_custom_call.1} parent=1 // pred_check_branch
      %3542 = sbr.rel (0) target = $region61
    $region60: #{tpu_custom_call.1} parent=1 // pred_region
      _
    $region61: #{tpu_custom_call.1} parent=1 // pred_fallthru
      _
    %3543 = vsyncpa [#allocation4], 1
    %3544 = vsyncpa [#allocation6], 1
    %3545 = vsyncpa [#allocation9], 1
    %3546 = vsyncpa [#allocation12], 1

</llo_original>
